<compile_context>
chip_gen: v7x
topology: tpu7x:2x2x1
jax: 0.10.0
libtpu: 0.0.40
codegen_flags: <defaults>
</compile_context>

<pallas_src>
import functools

import numpy as np
import jax
import jax.numpy as jnp
from jax.experimental import pallas as pl
from jax.experimental.pallas import tpu as pltpu

NEG_SLOPE = 0.01      # torch.nn.LeakyReLU default
BN_EPS = 1e-5
F32 = jnp.float32


def _leaky(v):
    # valid for 0 < slope < 1
    return jnp.maximum(v, NEG_SLOPE * v)


def _round8(v):
    return ((v + 7) // 8) * 8


# ----------------------------------------------------------------------------- #
# The fused kernel: one grid step == one group of B subjects (B*E rows).
# ----------------------------------------------------------------------------- #
def _sleepnet_kernel(x_ref, add_ref, pad_ref, slab_ref, mask_ref, out_ref, *, offs, cfg):
    def P(name):
        off, r, c = offs[name]
        return slab_ref[off:off + r, :c]

    dot = functools.partial(jnp.dot, preferred_element_type=F32)

    # ---- ECG CNN stack (convs + BatchNorms folded into dense per-stage operators)
    h = x_ref[...]                                          # (R, Cin*L), 'cl' layout
    for i, act in enumerate(cfg["ecg_acts"]):
        if act:
            h = _leaky(h)
        h = dot(h, P(f"ecg_m{i}")) + P(f"ecg_b{i}")         # (R, L_i*n_ch), 'lc' layout

    # ---- MaxPool windows (AvgPool + ecg_dense + additional_dense are pre-folded)
    n_ch, n_pool = cfg["n_ch"], cfg["n_pool"]
    pool_s, pool_k = cfg["pool_s"], cfg["pool_k"]
    pools = []
    for q in range(n_pool):
        base = q * pool_s * n_ch
        m = h[:, base:base + n_ch]
        for u in range(1, pool_k):
            m = jnp.maximum(m, h[:, base + u * n_ch: base + (u + 1) * n_ch])
        pools.append(m)
    pooled = jnp.concatenate(pools, axis=1)                 # (R, n_pool*n_ch)

    # ---- [additional_dense | ecg_dense] in ONE matmul -> features_in ------------
    f_in = dot(jnp.concatenate([add_ref[...], h, pooled], axis=1),
               P("w_feat")) + P("b_feat")                   # (R, n_feat)

    # ---- inner LayeredDenseBlockRes (lin0 + down0 + outer-down fused into 1 dot) -
    C = cfg["channels"]
    a0 = P("in_aff0")
    hh = f_in * a0[0:1, :] + a0[1:2, :]
    if cfg["inner_acts"][0]:
        hh = _leaky(hh)
    t1 = dot(jnp.concatenate([hh, f_in], axis=1), P("w_in1")) + P("b_in1")   # (R, 2C)
    y0, res = t1[:, :C], t1[:, C:2 * C]
    a1 = P("in_aff1")
    h1 = y0 * a1[0:1, :] + a1[1:2, :]
    if cfg["inner_acts"][1]:
        h1 = _leaky(h1)
    y1 = dot(h1, P("w_in2")) + P("b_in2") + y0
    feat = (y1 + res) * pad_ref[...]                        # padding_eliminator

    # ---- TCN: 3 dilated taps fused into ONE matmul/block; shifts via roll + mask -
    R = feat.shape[0]
    cur = feat
    for bi, d in enumerate(cfg["dilations"]):
        a = P(f"tcn_aff{bi}")
        hh = _leaky(cur * a[0:1, :] + a[1:2, :])
        # hp[t] = hh[t-d], hn[t] = hh[t+d]; masks zero the rows that would leak
        # across subject boundaries inside the batched group (and the wrapped rows).
        hp = pltpu.roll(hh, d, axis=0) * mask_ref[:, 2 * bi:2 * bi + 1]
        hn = pltpu.roll(hh, R - d, axis=0) * mask_ref[:, 2 * bi + 1:2 * bi + 2]
        conv = dot(jnp.concatenate([hp, hh, hn], axis=1), P(f"tcn_w{bi}")) + P(f"tcn_b{bi}")
        cur = conv + cur
    tcn_out = cur + feat

    # ---- outer LayeredDenseBlockRes (3 head matmuls fused into 1) + Softmax ------
    oa = P("out_aff")
    hh = tcn_out * oa[0:1, :] + oa[1:2, :]
    if cfg["outer_acts"][0]:
        hh = _leaky(hh)
    yy = dot(hh, P("w_out1")) + P("b_out1") + tcn_out
    h2 = yy * oa[2:3, :] + oa[3:4, :]
    if cfg["outer_acts"][1]:
        h2 = _leaky(h2)
    z = dot(jnp.concatenate([h2, yy, tcn_out], axis=1), P("w_out2")) + P("b_out2")
    e = jnp.exp(z - jnp.max(z, axis=-1, keepdims=True))
    labels = e * pl.reciprocal(jnp.sum(e, axis=-1, keepdims=True), approx=True)

    # ---- single combined store: [features | labels] -----------------------------
    # TODO(synk): a fully 128-lane-dense (B, E*C) store would need an in-kernel
    # (B*E, C) -> (B, E*C) relayout; kept as one combined (B*E, C+stages) slab instead.
    out_ref[:, 0:C] = feat
    out_ref[:, C:C + cfg["stages"]] = labels


# ----------------------------------------------------------------------------- #
# Wrapper: single pallas_call, grid over subject GROUPS (>=2 steps when possible).
# ----------------------------------------------------------------------------- #
def sleepnet_forward_pallas(folded, ecg_input, additional_input, padding_eliminator,
                            max_group=32):
    cfg, offs, slab = folded["cfg"], folded["offs"], folded["slab"]
    S, E = ecg_input.shape[0], ecg_input.shape[1]
    cin, L = ecg_input.shape[2], ecg_input.shape[3]
    n_add = additional_input.shape[-1]
    C, stages = cfg["channels"], cfg["stages"]

    # B subjects per grid step; keep >=2 grid steps (v7x megacore) when S >= 2.
    B = max(1, min(int(max_group), (S + 1) // 2)) if S > 1 else 1
    G = -(-S // B)
    Sp = G * B
    rows = B * E

    x = ecg_input.reshape(S, E, cin * L).astype(F32)
    add = additional_input.reshape(S, E, n_add).astype(F32)
    pad = padding_eliminator.reshape(S, E, 1).astype(F32)
    if Sp != S:
        def _pad(a):
            return jnp.concatenate([a, jnp.zeros((Sp - S,) + a.shape[1:], F32)], axis=0)
        x, add, pad = _pad(x), _pad(add), _pad(pad)
    x = x.reshape(G, rows, cin * L)
    add = add.reshape(G, rows, n_add)
    pad = pad.reshape(G, rows, 1)

    # Per-row TCN boundary masks (depend on the chosen group size B).
    n_tcn = len(cfg["dilations"])
    masks_np = np.ones((rows, 2 * n_tcn), np.float32)
    epos = np.arange(rows) % E
    for bi, d in enumerate(cfg["dilations"]):
        masks_np[:, 2 * bi] = (epos >= d).astype(np.float32)
        masks_np[:, 2 * bi + 1] = (epos < E - d).astype(np.float32)
    masks = jnp.asarray(masks_np)

    kernel = functools.partial(_sleepnet_kernel, offs=offs, cfg=cfg)

    out = pl.pallas_call(
        kernel,
        out_shape=jax.ShapeDtypeStruct((G, rows, C + stages), F32),
        grid=(G,),
        in_specs=[
            pl.BlockSpec((None, rows, cin * L), lambda g: (g, 0, 0)),
            pl.BlockSpec((None, rows, n_add), lambda g: (g, 0, 0)),
            pl.BlockSpec((None, rows, 1), lambda g: (g, 0, 0)),
            pl.BlockSpec(slab.shape, lambda g: (0, 0)),
            pl.BlockSpec(masks.shape, lambda g: (0, 0)),
        ],
        out_specs=pl.BlockSpec((None, rows, C + stages), lambda g: (g, 0, 0)),
        compiler_params=pltpu.CompilerParams(dimension_semantics=("parallel",)),
    )(x, add, pad, slab, masks)

    out = out.reshape(Sp, E, C + stages)[:S]
    feats = out[:, :, :C]
    labels = out[:, :, C:C + stages]
    return labels, feats


# ----------------------------------------------------------------------------- #
# Parameter folding (once, outside jit): BN -> affine, convs -> dense operators,
# avg-pool + ecg/additional dense -> one matmul, inner/outer residual dense and
# TCN taps fused, everything packed into a single lane-dense slab.
# ----------------------------------------------------------------------------- #
def _bn_scale_shift_np(bn):
    g = np.asarray(bn["gamma"], np.float32)
    b = np.asarray(bn["beta"], np.float32)
    m = np.asarray(bn["mean"], np.float32)
    v = np.asarray(bn["var"], np.float32)
    s = g / np.sqrt(v + BN_EPS)
    return s, b - m * s


def _conv1d_matrix(w, b, length, stride, dilation, in_layout, out_layout):
    """Dense operator for Conv1d: (Cin*L, Cout*Lout) acting on flattened rows."""
    w = np.asarray(w, np.float32)
    b = np.asarray(b, np.float32)
    cout, cin, k = w.shape
    lout = (length - dilation * (k - 1) - 1) // stride + 1
    mat = np.zeros((cin * length, cout * lout), np.float32)
    bias = np.zeros((cout * lout,), np.float32)
    for j in range(lout):
        for kk in range(k):
            lin = j * stride + kk * dilation
            for ci in range(cin):
                r = ci * length + lin if in_layout == "cl" else lin * cin + ci
                for co in range(cout):
                    c = co * lout + j if out_layout == "cl" else j * cout + co
                    mat[r, c] += w[co, ci, kk]
    for j in range(lout):
        for co in range(cout):
            c = co * lout + j if out_layout == "cl" else j * cout + co
            bias[c] = b[co]
    return mat, bias, lout


def _flat_affine(s, t, length, layout):
    if layout == "cl":
        return np.repeat(s, length), np.repeat(t, length)
    return np.tile(s, length), np.tile(t, length)


def fold_params(params, net, ecg_len):
    # TODO(synk): the inner/outer dense fold is specialized to the 2-block config
    # produced by make_net_parameters; generalize if layer counts change.
    entries, order = {}, []

    def add(name, arr):
        a = np.asarray(arr, np.float32)
        if a.ndim == 1:
            a = a.reshape(1, -1)
        entries[name] = a
        order.append(name)

    # ---- ECG CNN stack -> per-stage (M, b) with BNs folded ----------------------
    stride = net["ecg_stride"]
    cur_len = ecg_len
    stages_mb, acts = [], []
    for i, blk in enumerate(params["ecg_cnns"]):
        in_layout = "cl" if i == 0 else "lc"
        mat, bias, out_len = _conv1d_matrix(blk["conv"]["w"], blk["conv"]["b"],
                                            cur_len, stride, 1, in_layout, "lc")
        if blk["bn"] is not None:
            s, t = _bn_scale_shift_np(blk["bn"])
            s_f, t_f = _flat_affine(s, t, cur_len, in_layout)
            if i == 0:
                bias = bias + t_f @ mat            # BN before conv0 (no activation)
                mat = s_f[:, None] * mat
            else:                                  # BN before LeakyReLU -> fold into
                pm, pb = stages_mb[-1]             # the previous stage's output
                stages_mb[-1] = (pm * s_f[None, :], pb * s_f + t_f)
        acts.append(bool(blk["act"]))
        stages_mb.append((mat, bias))
        cur_len = out_len
    n_ch = int(np.asarray(params["ecg_cnns"][-1]["conv"]["w"]).shape[0])
    for i, (m, b) in enumerate(stages_mb):
        add(f"ecg_m{i}", m)
        add(f"ecg_b{i}", b)

    # ---- additional_dense + avg-pool + ecg_dense fused into one matmul ----------
    n_pool = int(net["ecg_pool_features"])
    pool_s = cur_len // n_pool
    pool_k = cur_len - (n_pool - 1) * pool_s
    w_ed = np.asarray(params["ecg_dense"]["w"], np.float32)
    b_ed = np.asarray(params["ecg_dense"]["b"], np.float32)
    n_ed = w_ed.shape[1]
    a_avg = np.zeros((cur_len * n_ch, n_ch * n_pool), np.float32)
    for c in range(n_ch):
        for q in range(n_pool):
            for u in range(pool_k):
                a_avg[(q * pool_s + u) * n_ch + c, c * n_pool + q] = 1.0 / pool_k
    w_avg = a_avg @ w_ed[:n_ch * n_pool, :]
    w_max = np.zeros((n_pool * n_ch, n_ed), np.float32)
    for q in range(n_pool):
        for c in range(n_ch):
            w_max[q * n_ch + c, :] = w_ed[n_ch * n_pool + c * n_pool + q, :]
    w_add = np.asarray(params["additional_dense"]["w"], np.float32)
    b_add = np.asarray(params["additional_dense"]["b"], np.float32)
    n_add, n_addo = w_add.shape
    n_feat = n_addo + n_ed
    w_feat = np.zeros((n_add + cur_len * n_ch + n_pool * n_ch, n_feat), np.float32)
    w_feat[:n_add, :n_addo] = w_add
    w_feat[n_add:n_add + cur_len * n_ch, n_addo:] = w_avg
    w_feat[n_add + cur_len * n_ch:, n_addo:] = w_max
    add("w_feat", w_feat)
    add("b_feat", np.concatenate([b_add, b_ed]))

    # ---- inner LayeredDenseBlockRes ----------------------------------------------
    inn = params["inner_dense"]
    assert len(inn["blocks"]) == 2
    ib0, ib1 = inn["blocks"]
    assert ib0["down"] is not None and ib1["down"] is None and inn["down"] is not None
    C = int(np.asarray(ib0["lin"]["w"]).shape[1])
    s, t = _bn_scale_shift_np(ib0["bn"])
    add("in_aff0", np.stack([s, t]))
    w0 = np.asarray(ib0["lin"]["w"], np.float32)
    b0 = np.asarray(ib0["lin"]["b"], np.float32)
    wd0 = np.asarray(ib0["down"]["w"], np.float32)
    bd0 = np.asarray(ib0["down"]["b"], np.float32)
    wdd = np.asarray(inn["down"]["w"], np.float32)
    bdd = np.asarray(inn["down"]["b"], np.float32)
    w_in1 = np.zeros((2 * n_feat, 2 * C), np.float32)
    w_in1[:n_feat, :C] = w0
    w_in1[n_feat:, :C] = wd0
    w_in1[n_feat:, C:] = wdd
    add("w_in1", w_in1)
    add("b_in1", np.concatenate([b0 + bd0, bdd]))
    s, t = _bn_scale_shift_np(ib1["bn"])
    add("in_aff1", np.stack([s, t]))
    add("w_in2", ib1["lin"]["w"])
    add("b_in2", ib1["lin"]["b"])
    inner_acts = (bool(ib0["act"]), bool(ib1["act"]))

    # ---- TCN -----------------------------------------------------------------------
    tcn = params["tcn"]
    assert tcn["down"] is None
    dils = []
    for bi, blk in enumerate(tcn["blocks"]):
        assert blk["down"] is None and blk["padding"] == 2 * blk["dilation"]
        s, t = _bn_scale_shift_np(blk["bn"])
        add(f"tcn_aff{bi}", np.stack([s, t]))
        w = np.asarray(blk["conv"]["w"], np.float32)          # (Cout, Cin, 3)
        add(f"tcn_w{bi}", np.concatenate([w[:, :, 0].T, w[:, :, 1].T, w[:, :, 2].T], axis=0))
        add(f"tcn_b{bi}", blk["conv"]["b"])
        dils.append(int(blk["dilation"]))

    # ---- outer LayeredDenseBlockRes -------------------------------------------------
    od = params["outer_dense"]
    ob0, ob1 = od["blocks"]
    assert ob0["down"] is None and ob1["down"] is not None and od["down"] is not None
    s0, t0 = _bn_scale_shift_np(ob0["bn"])
    s1, t1 = _bn_scale_shift_np(ob1["bn"])
    add("out_aff", np.stack([s0, t0, s1, t1]))
    add("w_out1", ob0["lin"]["w"])
    add("b_out1", ob0["lin"]["b"])
    w5 = np.concatenate([np.asarray(ob1["lin"]["w"], np.float32),
                         np.asarray(ob1["down"]["w"], np.float32),
                         np.asarray(od["down"]["w"], np.float32)], axis=0)
    b5 = (np.asarray(ob1["lin"]["b"], np.float32)
          + np.asarray(ob1["down"]["b"], np.float32)
          + np.asarray(od["down"]["b"], np.float32))
    add("w_out2", w5)
    add("b_out2", b5)
    outer_acts = (bool(ob0["act"]), bool(ob1["act"]))
    stages = int(w5.shape[1])

    # ---- pack everything into one lane-dense (rows, 128k) slab ----------------------
    width = max(a.shape[1] for a in entries.values())
    width = ((width + 127) // 128) * 128
    offs, off = {}, 0
    for name in order:
        a = entries[name]
        offs[name] = (int(off), int(a.shape[0]), int(a.shape[1]))
        off = _round8(off + a.shape[0])
    slab = np.zeros((max(8, _round8(off)), width), np.float32)
    for name in order:
        o, r, c = offs[name]
        slab[o:o + r, :c] = entries[name]

    cfg = dict(ecg_acts=tuple(acts), n_ch=n_ch, n_pool=n_pool, pool_s=int(pool_s),
               pool_k=int(pool_k), n_feat=int(n_feat), channels=C,
               inner_acts=inner_acts, dilations=tuple(dils), outer_acts=outer_acts,
               stages=stages)
    return dict(slab=jnp.asarray(slab), offs=offs, cfg=cfg)


# ----------------------------------------------------------------------------- #
# Plain-JAX (XLA) reference of the same eval-mode forward, for cross-checking.
# ----------------------------------------------------------------------------- #
def reference_forward(params, net, ecg_input, additional_input, padding_eliminator):
    def bn_scale_shift(bn):
        s = bn["gamma"] / jnp.sqrt(bn["var"] + BN_EPS)
        return s, bn["beta"] - bn["mean"] * s

    def leaky(v):
        return jnp.where(v >= 0, v, NEG_SLOPE * v)

    def bn_act_rows(x, bn, act):
        s, t = bn_scale_shift(bn)
        y = x * s + t
        return leaky(y) if act else y

    def bn_act_ncl(x, bn, act):
        s, t = bn_scale_shift(bn)
        y = x * s[None, :, None] + t[None, :, None]
        return leaky(y) if act else y

    def conv1d(x, w, b, stride=1, padding=0, dilation=1):
        y = jax.lax.conv_general_dilated(
            x, w, window_strides=(stride,), padding=[(padding, padding)],
            rhs_dilation=(dilation,), dimension_numbers=("NCH", "OIH", "NCH"))
        return y + b[None, :, None]

    def dense_block(p, x):
        h = bn_act_rows(x, p["bn"], p["act"])
        out = h @ p["lin"]["w"] + p["lin"]["b"]
        res = x if p["down"] is None else x @ p["down"]["w"] + p["down"]["b"]
        return out + res

    def layered_dense(p, x):
        o = x
        for blk in p["blocks"]:
            o = dense_block(blk, o)
        res = x if p["down"] is None else x @ p["down"]["w"] + p["down"]["b"]
        return o + res

    S = ecg_input.shape[0]
    x = ecg_input.reshape(-1, ecg_input.shape[-2], ecg_input.shape[-1])
    a = additional_input.reshape(-1, additional_input.shape[-1])

    for blk in params["ecg_cnns"]:
        if blk["bn"] is not None:
            x = bn_act_ncl(x, blk["bn"], blk["act"])
        elif blk["act"]:
            x = leaky(x)
        x = conv1d(x, blk["conv"]["w"], blk["conv"]["b"], stride=net["ecg_stride"])

    in_size = x.shape[-1]
    n_pool = net["ecg_pool_features"]
    ps = in_size // n_pool
    pk = in_size - (n_pool - 1) * ps
    idx = ps * jnp.arange(n_pool)[:, None] + jnp.arange(pk)[None, :]
    win = x[:, :, idx]
    avg = jnp.mean(win, axis=-1).reshape(x.shape[0], -1)
    mx = jnp.max(win, axis=-1).reshape(x.shape[0], -1)
    comb = jnp.concatenate([avg, mx], axis=1)
    ecg_out = comb @ params["ecg_dense"]["w"] + params["ecg_dense"]["b"]
    add_out = a @ params["additional_dense"]["w"] + params["additional_dense"]["b"]

    f_in = jnp.concatenate([add_out, ecg_out], axis=1)
    out = layered_dense(params["inner_dense"], f_in)
    out = out.reshape(S, -1, out.shape[-1])
    f_out = out * padding_eliminator

    t = jnp.transpose(f_out, (0, 2, 1))
    cur = t
    for blk in params["tcn"]["blocks"]:
        h = bn_act_ncl(cur, blk["bn"], True)
        h = conv1d(h, blk["conv"]["w"], blk["conv"]["b"], stride=1,
                   padding=blk["padding"], dilation=blk["dilation"])
        c = blk["padding"] // 2
        h = h[:, :, c:-c]
        res = cur if blk["down"] is None else conv1d(cur, blk["down"]["w"], blk["down"]["b"])
        cur = h + res
    res = t if params["tcn"]["down"] is None else conv1d(
        t, params["tcn"]["down"]["w"], params["tcn"]["down"]["b"])
    cur = cur + res

    o2 = jnp.transpose(cur, (0, 2, 1)).reshape(-1, cur.shape[1])
    o2 = layered_dense(params["outer_dense"], o2)
    lab = jax.nn.softmax(o2, axis=1)
    return lab.reshape(S, -1, lab.shape[-1]), f_out


# ----------------------------------------------------------------------------- #
# Deterministic synthetic parameter init (mirrors SleepNet.__init__ shapes)
# ----------------------------------------------------------------------------- #
class KeyGen:
    def __init__(self, seed):
        self._key = jax.random.PRNGKey(seed)
        self._i = 0

    def __call__(self):
        self._i += 1
        return jax.random.fold_in(self._key, self._i)


def init_linear(kg, n_in, n_out):
    std = (2.0 / (n_in + n_out)) ** 0.5
    return {"w": std * jax.random.normal(kg(), (n_in, n_out), F32),
            "b": 0.01 * jax.random.normal(kg(), (n_out,), F32)}


def init_conv(kg, c_in, c_out, k):
    std = (2.0 / (c_in * k + c_out * k)) ** 0.5
    return {"w": std * jax.random.normal(kg(), (c_out, c_in, k), F32),
            "b": 0.01 * jax.random.normal(kg(), (c_out,), F32)}


def init_bn(kg, c):
    return {"gamma": jax.random.normal(kg(), (c,), F32),
            "beta": 0.01 * jax.random.normal(kg(), (c,), F32),
            "mean": jnp.zeros((c,), F32),
            "var": jnp.ones((c,), F32)}


def init_ecg_cnns(kg, p):
    cl, lc, bnf = p["ecg_channels_list"], p["ecg_layer_count"], p["ecg_batch_norm"]
    blocks = []
    for i in range(lc):
        cin = cl[0] if i == 0 else cl[1]
        cout = cl[2] if i == lc - 1 else cl[1]
        use_bn = bnf[0] if i == 0 else bnf[1]
        blocks.append(dict(
            bn=init_bn(kg, cin) if use_bn else None,
            act=(i > 0),                       # LeakyReLU only for i > 0
            conv=init_conv(kg, cin, cout, p["ecg_kernel"]),
        ))
    return blocks


def init_dense_block_res(kg, n_in, n_out, activation):
    return dict(bn=init_bn(kg, n_in), act=activation, lin=init_linear(kg, n_in, n_out),
                down=init_linear(kg, n_in, n_out) if n_in != n_out else None)


def init_layered_dense(kg, layer_count, cl, act_list):
    blocks = []
    for i in range(layer_count):
        n_in = cl[0] if i == 0 else cl[1]
        n_out = cl[2] if i == layer_count - 1 else cl[1]
        if i == 0:
            a = act_list[0]
        elif i == layer_count - 1:
            a = act_list[2]
        else:
            a = act_list[1]
        blocks.append(init_dense_block_res(kg, n_in, n_out, a))
    down = init_linear(kg, cl[0], cl[2]) if cl[0] != cl[2] else None
    return dict(blocks=blocks, down=down)


def init_tcn(kg, layer_count, cl, k=3):
    blocks = []
    for i in range(layer_count):
        n_in = cl[0] if i == 0 else cl[1]
        n_out = cl[2] if i == layer_count - 1 else cl[1]
        blocks.append(dict(
            bn=init_bn(kg, n_in),
            conv=init_conv(kg, n_in, n_out, k),
            down=init_conv(kg, n_in, n_out, 1) if n_in != n_out else None,
            dilation=2 ** i,
            padding=(k - 1) * (2 ** i),
        ))
    down = init_conv(kg, cl[0], cl[2], 1) if cl[0] != cl[2] else None
    return dict(blocks=blocks, down=down)


def make_net_parameters():
    p = dict(
        additional_features=4, ecg_dense_features=8,
        ecg_layer_count=2, ecg_channels_list=[2, 4, 4], ecg_kernel=3, ecg_stride=2,
        cnn_dropout=0.0, ecg_batch_norm=[True, True], ecg_pool_features=4,
        inner_dense_layer_count=2, inner_dense_channel_list=[None, 16, 16],
        dense_dropout=0.0, inner_dense_activation_list=[True, True, True],
        tcn_layer_count=2, tcn_channel_list=[None, 16, 16], tcn_dropout=0.0,
        outer_dense_layer_count=2, outer_dense_channel_list=[16, 16, None],
        outer_dense_activation_list=[True, True, True], stage_count=5,
    )
    p["inner_dense_channel_list"][0] = p["additional_features"] + p["ecg_dense_features"]
    p["tcn_channel_list"][0] = p["inner_dense_channel_list"][-1]
    p["outer_dense_channel_list"][-1] = p["stage_count"]
    return p


def build_params(seed, p):
    kg = KeyGen(seed)
    return dict(
        ecg_cnns=init_ecg_cnns(kg, p),
        ecg_dense=init_linear(kg, 2 * p["ecg_pool_features"] * p["ecg_channels_list"][2],
                              p["ecg_dense_features"]),
        additional_dense=init_linear(kg, p["additional_features"], p["additional_features"]),
        inner_dense=init_layered_dense(kg, p["inner_dense_layer_count"],
                                       p["inner_dense_channel_list"],
                                       p["inner_dense_activation_list"]),
        tcn=init_tcn(kg, p["tcn_layer_count"], p["tcn_channel_list"], k=3),
        outer_dense=init_layered_dense(kg, p["outer_dense_layer_count"],
                                       p["outer_dense_channel_list"],
                                       p["outer_dense_activation_list"]),
    )


# ----------------------------------------------------------------------------- #
if __name__ == "__main__":
    NET = make_net_parameters()
    params = build_params(1234, NET)

    subjects, epochs, L_ecg = 5, 8, 64            # 5 subjects -> 2 groups of 3 (1 padded)
    key = jax.random.PRNGKey(0)
    k1, k2, k3 = jax.random.split(key, 3)
    ecg_input = jax.random.normal(
        k1, (subjects, epochs, NET["ecg_channels_list"][0], L_ecg), F32)
    additional_input = jax.random.normal(
        k2, (subjects, epochs, NET["additional_features"]), F32)
    padding_eliminator = (jax.random.uniform(k3, (subjects, epochs, 1)) > 0.2).astype(F32)

    folded = fold_params(params, NET, L_ecg)
    fwd = jax.jit(functools.partial(sleepnet_forward_pallas, folded))
    labels_out, features_out = fwd(ecg_input, additional_input, padding_eliminator)
    jax.block_until_ready((labels_out, features_out))

    assert labels_out.shape == (subjects, epochs, NET["stage_count"])
    assert features_out.shape == (subjects, epochs, NET["inner_dense_channel_list"][-1])
    assert bool(jnp.all(jnp.isfinite(labels_out)))
    # approx reciprocal in the softmax -> allow a slightly loose row-sum tolerance
    assert bool(jnp.allclose(jnp.sum(labels_out, axis=-1), 1.0, atol=1e-2))

    # Cross-check the fused Pallas kernel against the plain-JAX reference.
    # (loose tolerance: different f32 matmul decompositions between Mosaic and XLA)
    ref_labels, ref_feats = reference_forward(
        params, NET, ecg_input, additional_input, padding_eliminator)
    assert bool(jnp.allclose(labels_out, ref_labels, atol=2e-2, rtol=2e-2))
    assert bool(jnp.allclose(features_out, ref_feats, atol=2e-2, rtol=2e-2))

    print("KERNEL_OK")
</pallas_src>

<mosaic_0001>
module attributes {stable_mosaic.version = 11 : i64} {
  func.func @_sleepnet_kernel(%arg0: i32, %arg1: memref<1x24x128xf32, #tpu.memory_space<vmem>>, %arg2: memref<1x24x4xf32, #tpu.memory_space<vmem>>, %arg3: memref<1x24x1xf32, #tpu.memory_space<vmem>>, %arg4: memref<648x128xf32, #tpu.memory_space<vmem>>, %arg5: memref<24x4xf32, #tpu.memory_space<vmem>>, %arg6: memref<1x24x21xf32, #tpu.memory_space<vmem>>) attributes {dimension_semantics = [#tpu.dimension_semantics<parallel>], iteration_bounds = array<i64: 2>, scalar_prefetch = 0 : i64, scratch_operands = 0 : i64, tpu.core_type = #tpu.core_type<tc>, window_params = [{transform_indices = @transform_0, window_bounds = array<i64: 1, 24, 128>}, {transform_indices = @transform_1, window_bounds = array<i64: 1, 24, 4>}, {transform_indices = @transform_2, window_bounds = array<i64: 1, 24, 1>}, {pipeline_mode = #tpu.pipeline_mode<synchronous>, transform_indices = @transform_3, window_bounds = array<i64: 648, 128>}, {pipeline_mode = #tpu.pipeline_mode<synchronous>, transform_indices = @transform_4, window_bounds = array<i64: 24, 4>}, {transform_indices = @transform_5, window_bounds = array<i64: 1, 24, 21>}]} {
    %c0 = arith.constant 0 : index
    %c0_0 = arith.constant 0 : index
    %c0_1 = arith.constant 0 : index
    %0 = vector.load %arg1[%c0, %c0_0, %c0_1] : memref<1x24x128xf32, #tpu.memory_space<vmem>>, vector<1x24x128xf32>
    %1 = vector.shape_cast %0 : vector<1x24x128xf32> to vector<24x128xf32>
    %c0_2 = arith.constant 0 : index
    %c0_3 = arith.constant 0 : index
    %2 = vector.load %arg4[%c0_2, %c0_3] : memref<648x128xf32, #tpu.memory_space<vmem>>, vector<128x124xf32>
    %cst = arith.constant dense<0.000000e+00> : vector<24x124xf32>
    %3 = tpu.matmul %1, %2, %cst {dimension_numbers = #tpu.dot_dimension_numbers<[1], [0], [0], [1], [0, 0, 1, 1], [], []>} : vector<24x128xf32>, vector<128x124xf32>, vector<24x124xf32> -> vector<24x124xf32>
    %c128 = arith.constant 128 : index
    %c0_4 = arith.constant 0 : index
    %4 = vector.load %arg4[%c128, %c0_4] : memref<648x128xf32, #tpu.memory_space<vmem>>, vector<1x124xf32>
    %5 = vector.broadcast %4 : vector<1x124xf32> to vector<24x124xf32>
    %6 = arith.addf %3, %5 : vector<24x124xf32>
    %cst_5 = arith.constant 0.00999999977 : f32
    %7 = vector.broadcast %cst_5 : f32 to vector<24x124xf32>
    %8 = arith.mulf %7, %6 : vector<24x124xf32>
    %9 = arith.maximumf %6, %8 : vector<24x124xf32>
    %c136 = arith.constant 136 : index
    %c0_6 = arith.constant 0 : index
    %10 = vector.load %arg4[%c136, %c0_6] : memref<648x128xf32, #tpu.memory_space<vmem>>, vector<124x60xf32>
    %cst_7 = arith.constant dense<0.000000e+00> : vector<24x60xf32>
    %11 = tpu.matmul %9, %10, %cst_7 {dimension_numbers = #tpu.dot_dimension_numbers<[1], [0], [0], [1], [0, 0, 1, 1], [], []>} : vector<24x124xf32>, vector<124x60xf32>, vector<24x60xf32> -> vector<24x60xf32>
    %c264 = arith.constant 264 : index
    %c0_8 = arith.constant 0 : index
    %12 = vector.load %arg4[%c264, %c0_8] : memref<648x128xf32, #tpu.memory_space<vmem>>, vector<1x60xf32>
    %13 = vector.broadcast %12 : vector<1x60xf32> to vector<24x60xf32>
    %14 = arith.addf %11, %13 : vector<24x60xf32>
    %15 = vector.extract_strided_slice %14 {offsets = [0, 0], sizes = [24, 4], strides = [1, 1]} : vector<24x60xf32> to vector<24x4xf32>
    %16 = vector.extract_strided_slice %14 {offsets = [0, 4], sizes = [24, 4], strides = [1, 1]} : vector<24x60xf32> to vector<24x4xf32>
    %17 = arith.maximumf %15, %16 : vector<24x4xf32>
    %18 = vector.extract_strided_slice %14 {offsets = [0, 8], sizes = [24, 4], strides = [1, 1]} : vector<24x60xf32> to vector<24x4xf32>
    %19 = arith.maximumf %17, %18 : vector<24x4xf32>
    %20 = vector.extract_strided_slice %14 {offsets = [0, 12], sizes = [24, 4], strides = [1, 1]} : vector<24x60xf32> to vector<24x4xf32>
    %21 = arith.maximumf %19, %20 : vector<24x4xf32>
    %22 = vector.extract_strided_slice %14 {offsets = [0, 16], sizes = [24, 4], strides = [1, 1]} : vector<24x60xf32> to vector<24x4xf32>
    %23 = arith.maximumf %21, %22 : vector<24x4xf32>
    %24 = vector.extract_strided_slice %14 {offsets = [0, 20], sizes = [24, 4], strides = [1, 1]} : vector<24x60xf32> to vector<24x4xf32>
    %25 = arith.maximumf %23, %24 : vector<24x4xf32>
    %26 = vector.extract_strided_slice %14 {offsets = [0, 12], sizes = [24, 4], strides = [1, 1]} : vector<24x60xf32> to vector<24x4xf32>
    %27 = vector.extract_strided_slice %14 {offsets = [0, 16], sizes = [24, 4], strides = [1, 1]} : vector<24x60xf32> to vector<24x4xf32>
    %28 = arith.maximumf %26, %27 : vector<24x4xf32>
    %29 = vector.extract_strided_slice %14 {offsets = [0, 20], sizes = [24, 4], strides = [1, 1]} : vector<24x60xf32> to vector<24x4xf32>
    %30 = arith.maximumf %28, %29 : vector<24x4xf32>
    %31 = vector.extract_strided_slice %14 {offsets = [0, 24], sizes = [24, 4], strides = [1, 1]} : vector<24x60xf32> to vector<24x4xf32>
    %32 = arith.maximumf %30, %31 : vector<24x4xf32>
    %33 = vector.extract_strided_slice %14 {offsets = [0, 28], sizes = [24, 4], strides = [1, 1]} : vector<24x60xf32> to vector<24x4xf32>
    %34 = arith.maximumf %32, %33 : vector<24x4xf32>
    %35 = vector.extract_strided_slice %14 {offsets = [0, 32], sizes = [24, 4], strides = [1, 1]} : vector<24x60xf32> to vector<24x4xf32>
    %36 = arith.maximumf %34, %35 : vector<24x4xf32>
    %37 = vector.extract_strided_slice %14 {offsets = [0, 24], sizes = [24, 4], strides = [1, 1]} : vector<24x60xf32> to vector<24x4xf32>
    %38 = vector.extract_strided_slice %14 {offsets = [0, 28], sizes = [24, 4], strides = [1, 1]} : vector<24x60xf32> to vector<24x4xf32>
    %39 = arith.maximumf %37, %38 : vector<24x4xf32>
    %40 = vector.extract_strided_slice %14 {offsets = [0, 32], sizes = [24, 4], strides = [1, 1]} : vector<24x60xf32> to vector<24x4xf32>
    %41 = arith.maximumf %39, %40 : vector<24x4xf32>
    %42 = vector.extract_strided_slice %14 {offsets = [0, 36], sizes = [24, 4], strides = [1, 1]} : vector<24x60xf32> to vector<24x4xf32>
    %43 = arith.maximumf %41, %42 : vector<24x4xf32>
    %44 = vector.extract_strided_slice %14 {offsets = [0, 40], sizes = [24, 4], strides = [1, 1]} : vector<24x60xf32> to vector<24x4xf32>
    %45 = arith.maximumf %43, %44 : vector<24x4xf32>
    %46 = vector.extract_strided_slice %14 {offsets = [0, 44], sizes = [24, 4], strides = [1, 1]} : vector<24x60xf32> to vector<24x4xf32>
    %47 = arith.maximumf %45, %46 : vector<24x4xf32>
    %48 = vector.extract_strided_slice %14 {offsets = [0, 36], sizes = [24, 4], strides = [1, 1]} : vector<24x60xf32> to vector<24x4xf32>
    %49 = vector.extract_strided_slice %14 {offsets = [0, 40], sizes = [24, 4], strides = [1, 1]} : vector<24x60xf32> to vector<24x4xf32>
    %50 = arith.maximumf %48, %49 : vector<24x4xf32>
    %51 = vector.extract_strided_slice %14 {offsets = [0, 44], sizes = [24, 4], strides = [1, 1]} : vector<24x60xf32> to vector<24x4xf32>
    %52 = arith.maximumf %50, %51 : vector<24x4xf32>
    %53 = vector.extract_strided_slice %14 {offsets = [0, 48], sizes = [24, 4], strides = [1, 1]} : vector<24x60xf32> to vector<24x4xf32>
    %54 = arith.maximumf %52, %53 : vector<24x4xf32>
    %55 = vector.extract_strided_slice %14 {offsets = [0, 52], sizes = [24, 4], strides = [1, 1]} : vector<24x60xf32> to vector<24x4xf32>
    %56 = arith.maximumf %54, %55 : vector<24x4xf32>
    %57 = vector.extract_strided_slice %14 {offsets = [0, 56], sizes = [24, 4], strides = [1, 1]} : vector<24x60xf32> to vector<24x4xf32>
    %58 = arith.maximumf %56, %57 : vector<24x4xf32>
    %59 = tpu.concatenate %25, %36, %47, %58 in 1 : vector<24x4xf32>, vector<24x4xf32>, vector<24x4xf32>, vector<24x4xf32> -> vector<24x16xf32>
    %c0_9 = arith.constant 0 : index
    %c0_10 = arith.constant 0 : index
    %c0_11 = arith.constant 0 : index
    %60 = vector.load %arg2[%c0_9, %c0_10, %c0_11] : memref<1x24x4xf32, #tpu.memory_space<vmem>>, vector<1x24x4xf32>
    %61 = vector.shape_cast %60 : vector<1x24x4xf32> to vector<24x4xf32>
    %62 = tpu.concatenate %61, %14, %59 in 1 : vector<24x4xf32>, vector<24x60xf32>, vector<24x16xf32> -> vector<24x80xf32>
    %c272 = arith.constant 272 : index
    %c0_12 = arith.constant 0 : index
    %63 = vector.load %arg4[%c272, %c0_12] : memref<648x128xf32, #tpu.memory_space<vmem>>, vector<80x12xf32>
    %cst_13 = arith.constant dense<0.000000e+00> : vector<24x12xf32>
    %64 = tpu.matmul %62, %63, %cst_13 {dimension_numbers = #tpu.dot_dimension_numbers<[1], [0], [0], [1], [0, 0, 1, 1], [], []>} : vector<24x80xf32>, vector<80x12xf32>, vector<24x12xf32> -> vector<24x12xf32>
    %c352 = arith.constant 352 : index
    %c0_14 = arith.constant 0 : index
    %65 = vector.load %arg4[%c352, %c0_14] : memref<648x128xf32, #tpu.memory_space<vmem>>, vector<1x12xf32>
    %66 = vector.broadcast %65 : vector<1x12xf32> to vector<24x12xf32>
    %67 = arith.addf %64, %66 : vector<24x12xf32>
    %c360 = arith.constant 360 : index
    %c0_15 = arith.constant 0 : index
    %68 = vector.load %arg4[%c360, %c0_15] : memref<648x128xf32, #tpu.memory_space<vmem>>, vector<2x12xf32>
    %69 = vector.extract_strided_slice %68 {offsets = [0, 0], sizes = [1, 12], strides = [1, 1]} : vector<2x12xf32> to vector<1x12xf32>
    %70 = vector.broadcast %69 : vector<1x12xf32> to vector<24x12xf32>
    %71 = arith.mulf %67, %70 : vector<24x12xf32>
    %72 = vector.extract_strided_slice %68 {offsets = [1, 0], sizes = [1, 12], strides = [1, 1]} : vector<2x12xf32> to vector<1x12xf32>
    %73 = vector.broadcast %72 : vector<1x12xf32> to vector<24x12xf32>
    %74 = arith.addf %71, %73 : vector<24x12xf32>
    %cst_16 = arith.constant 0.00999999977 : f32
    %75 = vector.broadcast %cst_16 : f32 to vector<24x12xf32>
    %76 = arith.mulf %75, %74 : vector<24x12xf32>
    %77 = arith.maximumf %74, %76 : vector<24x12xf32>
    %78 = tpu.concatenate %77, %67 in 1 : vector<24x12xf32>, vector<24x12xf32> -> vector<24x24xf32>
    %c368 = arith.constant 368 : index
    %c0_17 = arith.constant 0 : index
    %79 = vector.load %arg4[%c368, %c0_17] : memref<648x128xf32, #tpu.memory_space<vmem>>, vector<24x32xf32>
    %cst_18 = arith.constant dense<0.000000e+00> : vector<24x32xf32>
    %80 = tpu.matmul %78, %79, %cst_18 {dimension_numbers = #tpu.dot_dimension_numbers<[1], [0], [0], [1], [0, 0, 1, 1], [], []>} : vector<24x24xf32>, vector<24x32xf32>, vector<24x32xf32> -> vector<24x32xf32>
    %c392 = arith.constant 392 : index
    %c0_19 = arith.constant 0 : index
    %81 = vector.load %arg4[%c392, %c0_19] : memref<648x128xf32, #tpu.memory_space<vmem>>, vector<1x32xf32>
    %82 = vector.broadcast %81 : vector<1x32xf32> to vector<24x32xf32>
    %83 = arith.addf %80, %82 : vector<24x32xf32>
    %84 = vector.extract_strided_slice %83 {offsets = [0, 0], sizes = [24, 16], strides = [1, 1]} : vector<24x32xf32> to vector<24x16xf32>
    %85 = vector.extract_strided_slice %83 {offsets = [0, 16], sizes = [24, 16], strides = [1, 1]} : vector<24x32xf32> to vector<24x16xf32>
    %c400 = arith.constant 400 : index
    %c0_20 = arith.constant 0 : index
    %86 = vector.load %arg4[%c400, %c0_20] : memref<648x128xf32, #tpu.memory_space<vmem>>, vector<2x16xf32>
    %87 = vector.extract_strided_slice %86 {offsets = [0, 0], sizes = [1, 16], strides = [1, 1]} : vector<2x16xf32> to vector<1x16xf32>
    %88 = vector.broadcast %87 : vector<1x16xf32> to vector<24x16xf32>
    %89 = arith.mulf %84, %88 : vector<24x16xf32>
    %90 = vector.extract_strided_slice %86 {offsets = [1, 0], sizes = [1, 16], strides = [1, 1]} : vector<2x16xf32> to vector<1x16xf32>
    %91 = vector.broadcast %90 : vector<1x16xf32> to vector<24x16xf32>
    %92 = arith.addf %89, %91 : vector<24x16xf32>
    %cst_21 = arith.constant 0.00999999977 : f32
    %93 = vector.broadcast %cst_21 : f32 to vector<24x16xf32>
    %94 = arith.mulf %93, %92 : vector<24x16xf32>
    %95 = arith.maximumf %92, %94 : vector<24x16xf32>
    %c408 = arith.constant 408 : index
    %c0_22 = arith.constant 0 : index
    %96 = vector.load %arg4[%c408, %c0_22] : memref<648x128xf32, #tpu.memory_space<vmem>>, vector<16x16xf32>
    %cst_23 = arith.constant dense<0.000000e+00> : vector<24x16xf32>
    %97 = tpu.matmul %95, %96, %cst_23 {dimension_numbers = #tpu.dot_dimension_numbers<[1], [0], [0], [1], [0, 0, 1, 1], [], []>} : vector<24x16xf32>, vector<16x16xf32>, vector<24x16xf32> -> vector<24x16xf32>
    %c424 = arith.constant 424 : index
    %c0_24 = arith.constant 0 : index
    %98 = vector.load %arg4[%c424, %c0_24] : memref<648x128xf32, #tpu.memory_space<vmem>>, vector<1x16xf32>
    %99 = vector.broadcast %98 : vector<1x16xf32> to vector<24x16xf32>
    %100 = arith.addf %97, %99 : vector<24x16xf32>
    %101 = arith.addf %100, %84 : vector<24x16xf32>
    %102 = arith.addf %101, %85 : vector<24x16xf32>
    %c0_25 = arith.constant 0 : index
    %c0_26 = arith.constant 0 : index
    %c0_27 = arith.constant 0 : index
    %103 = vector.load %arg3[%c0_25, %c0_26, %c0_27] : memref<1x24x1xf32, #tpu.memory_space<vmem>>, vector<1x24x1xf32>
    %104 = vector.shape_cast %103 : vector<1x24x1xf32> to vector<24x1xf32>
    %105 = vector.broadcast %104 : vector<24x1xf32> to vector<24x16xf32>
    %106 = arith.mulf %102, %105 : vector<24x16xf32>
    %c432 = arith.constant 432 : index
    %c0_28 = arith.constant 0 : index
    %107 = vector.load %arg4[%c432, %c0_28] : memref<648x128xf32, #tpu.memory_space<vmem>>, vector<2x16xf32>
    %108 = vector.extract_strided_slice %107 {offsets = [0, 0], sizes = [1, 16], strides = [1, 1]} : vector<2x16xf32> to vector<1x16xf32>
    %109 = vector.broadcast %108 : vector<1x16xf32> to vector<24x16xf32>
    %110 = arith.mulf %106, %109 : vector<24x16xf32>
    %111 = vector.extract_strided_slice %107 {offsets = [1, 0], sizes = [1, 16], strides = [1, 1]} : vector<2x16xf32> to vector<1x16xf32>
    %112 = vector.broadcast %111 : vector<1x16xf32> to vector<24x16xf32>
    %113 = arith.addf %110, %112 : vector<24x16xf32>
    %cst_29 = arith.constant 0.00999999977 : f32
    %114 = vector.broadcast %cst_29 : f32 to vector<24x16xf32>
    %115 = arith.mulf %114, %113 : vector<24x16xf32>
    %116 = arith.maximumf %113, %115 : vector<24x16xf32>
    %c1_i32 = arith.constant 1 : i32
    %117 = tpu.dynamic_rotate %116 by %c1_i32 dim 0 : vector<24x16xf32>, i32 -> vector<24x16xf32>
    %c0_30 = arith.constant 0 : index
    %c0_31 = arith.constant 0 : index
    %118 = vector.load %arg5[%c0_30, %c0_31] : memref<24x4xf32, #tpu.memory_space<vmem>>, vector<24x1xf32>
    %119 = vector.broadcast %118 : vector<24x1xf32> to vector<24x16xf32>
    %120 = arith.mulf %117, %119 : vector<24x16xf32>
    %c23_i32 = arith.constant 23 : i32
    %121 = tpu.dynamic_rotate %116 by %c23_i32 dim 0 : vector<24x16xf32>, i32 -> vector<24x16xf32>
    %c0_32 = arith.constant 0 : index
    %c1 = arith.constant 1 : index
    %122 = vector.load %arg5[%c0_32, %c1] : memref<24x4xf32, #tpu.memory_space<vmem>>, vector<24x1xf32>
    %123 = vector.broadcast %122 : vector<24x1xf32> to vector<24x16xf32>
    %124 = arith.mulf %121, %123 : vector<24x16xf32>
    %125 = tpu.concatenate %120, %116, %124 in 1 : vector<24x16xf32>, vector<24x16xf32>, vector<24x16xf32> -> vector<24x48xf32>
    %c440 = arith.constant 440 : index
    %c0_33 = arith.constant 0 : index
    %126 = vector.load %arg4[%c440, %c0_33] : memref<648x128xf32, #tpu.memory_space<vmem>>, vector<48x16xf32>
    %cst_34 = arith.constant dense<0.000000e+00> : vector<24x16xf32>
    %127 = tpu.matmul %125, %126, %cst_34 {dimension_numbers = #tpu.dot_dimension_numbers<[1], [0], [0], [1], [0, 0, 1, 1], [], []>} : vector<24x48xf32>, vector<48x16xf32>, vector<24x16xf32> -> vector<24x16xf32>
    %c488 = arith.constant 488 : index
    %c0_35 = arith.constant 0 : index
    %128 = vector.load %arg4[%c488, %c0_35] : memref<648x128xf32, #tpu.memory_space<vmem>>, vector<1x16xf32>
    %129 = vector.broadcast %128 : vector<1x16xf32> to vector<24x16xf32>
    %130 = arith.addf %127, %129 : vector<24x16xf32>
    %131 = arith.addf %130, %106 : vector<24x16xf32>
    %c496 = arith.constant 496 : index
    %c0_36 = arith.constant 0 : index
    %132 = vector.load %arg4[%c496, %c0_36] : memref<648x128xf32, #tpu.memory_space<vmem>>, vector<2x16xf32>
    %133 = vector.extract_strided_slice %132 {offsets = [0, 0], sizes = [1, 16], strides = [1, 1]} : vector<2x16xf32> to vector<1x16xf32>
    %134 = vector.broadcast %133 : vector<1x16xf32> to vector<24x16xf32>
    %135 = arith.mulf %131, %134 : vector<24x16xf32>
    %136 = vector.extract_strided_slice %132 {offsets = [1, 0], sizes = [1, 16], strides = [1, 1]} : vector<2x16xf32> to vector<1x16xf32>
    %137 = vector.broadcast %136 : vector<1x16xf32> to vector<24x16xf32>
    %138 = arith.addf %135, %137 : vector<24x16xf32>
    %cst_37 = arith.constant 0.00999999977 : f32
    %139 = vector.broadcast %cst_37 : f32 to vector<24x16xf32>
    %140 = arith.mulf %139, %138 : vector<24x16xf32>
    %141 = arith.maximumf %138, %140 : vector<24x16xf32>
    %c2_i32 = arith.constant 2 : i32
    %142 = tpu.dynamic_rotate %141 by %c2_i32 dim 0 : vector<24x16xf32>, i32 -> vector<24x16xf32>
    %c0_38 = arith.constant 0 : index
    %c2 = arith.constant 2 : index
    %143 = vector.load %arg5[%c0_38, %c2] : memref<24x4xf32, #tpu.memory_space<vmem>>, vector<24x1xf32>
    %144 = vector.broadcast %143 : vector<24x1xf32> to vector<24x16xf32>
    %145 = arith.mulf %142, %144 : vector<24x16xf32>
    %c22_i32 = arith.constant 22 : i32
    %146 = tpu.dynamic_rotate %141 by %c22_i32 dim 0 : vector<24x16xf32>, i32 -> vector<24x16xf32>
    %c0_39 = arith.constant 0 : index
    %c3 = arith.constant 3 : index
    %147 = vector.load %arg5[%c0_39, %c3] : memref<24x4xf32, #tpu.memory_space<vmem>>, vector<24x1xf32>
    %148 = vector.broadcast %147 : vector<24x1xf32> to vector<24x16xf32>
    %149 = arith.mulf %146, %148 : vector<24x16xf32>
    %150 = tpu.concatenate %145, %141, %149 in 1 : vector<24x16xf32>, vector<24x16xf32>, vector<24x16xf32> -> vector<24x48xf32>
    %c504 = arith.constant 504 : index
    %c0_40 = arith.constant 0 : index
    %151 = vector.load %arg4[%c504, %c0_40] : memref<648x128xf32, #tpu.memory_space<vmem>>, vector<48x16xf32>
    %cst_41 = arith.constant dense<0.000000e+00> : vector<24x16xf32>
    %152 = tpu.matmul %150, %151, %cst_41 {dimension_numbers = #tpu.dot_dimension_numbers<[1], [0], [0], [1], [0, 0, 1, 1], [], []>} : vector<24x48xf32>, vector<48x16xf32>, vector<24x16xf32> -> vector<24x16xf32>
    %c552 = arith.constant 552 : index
    %c0_42 = arith.constant 0 : index
    %153 = vector.load %arg4[%c552, %c0_42] : memref<648x128xf32, #tpu.memory_space<vmem>>, vector<1x16xf32>
    %154 = vector.broadcast %153 : vector<1x16xf32> to vector<24x16xf32>
    %155 = arith.addf %152, %154 : vector<24x16xf32>
    %156 = arith.addf %155, %131 : vector<24x16xf32>
    %157 = arith.addf %156, %106 : vector<24x16xf32>
    %c560 = arith.constant 560 : index
    %c0_43 = arith.constant 0 : index
    %158 = vector.load %arg4[%c560, %c0_43] : memref<648x128xf32, #tpu.memory_space<vmem>>, vector<4x16xf32>
    %159 = vector.extract_strided_slice %158 {offsets = [0, 0], sizes = [1, 16], strides = [1, 1]} : vector<4x16xf32> to vector<1x16xf32>
    %160 = vector.broadcast %159 : vector<1x16xf32> to vector<24x16xf32>
    %161 = arith.mulf %157, %160 : vector<24x16xf32>
    %162 = vector.extract_strided_slice %158 {offsets = [1, 0], sizes = [1, 16], strides = [1, 1]} : vector<4x16xf32> to vector<1x16xf32>
    %163 = vector.broadcast %162 : vector<1x16xf32> to vector<24x16xf32>
    %164 = arith.addf %161, %163 : vector<24x16xf32>
    %cst_44 = arith.constant 0.00999999977 : f32
    %165 = vector.broadcast %cst_44 : f32 to vector<24x16xf32>
    %166 = arith.mulf %165, %164 : vector<24x16xf32>
    %167 = arith.maximumf %164, %166 : vector<24x16xf32>
    %c568 = arith.constant 568 : index
    %c0_45 = arith.constant 0 : index
    %168 = vector.load %arg4[%c568, %c0_45] : memref<648x128xf32, #tpu.memory_space<vmem>>, vector<16x16xf32>
    %cst_46 = arith.constant dense<0.000000e+00> : vector<24x16xf32>
    %169 = tpu.matmul %167, %168, %cst_46 {dimension_numbers = #tpu.dot_dimension_numbers<[1], [0], [0], [1], [0, 0, 1, 1], [], []>} : vector<24x16xf32>, vector<16x16xf32>, vector<24x16xf32> -> vector<24x16xf32>
    %c584 = arith.constant 584 : index
    %c0_47 = arith.constant 0 : index
    %170 = vector.load %arg4[%c584, %c0_47] : memref<648x128xf32, #tpu.memory_space<vmem>>, vector<1x16xf32>
    %171 = vector.broadcast %170 : vector<1x16xf32> to vector<24x16xf32>
    %172 = arith.addf %169, %171 : vector<24x16xf32>
    %173 = arith.addf %172, %157 : vector<24x16xf32>
    %174 = vector.extract_strided_slice %158 {offsets = [2, 0], sizes = [1, 16], strides = [1, 1]} : vector<4x16xf32> to vector<1x16xf32>
    %175 = vector.broadcast %174 : vector<1x16xf32> to vector<24x16xf32>
    %176 = arith.mulf %173, %175 : vector<24x16xf32>
    %177 = vector.extract_strided_slice %158 {offsets = [3, 0], sizes = [1, 16], strides = [1, 1]} : vector<4x16xf32> to vector<1x16xf32>
    %178 = vector.broadcast %177 : vector<1x16xf32> to vector<24x16xf32>
    %179 = arith.addf %176, %178 : vector<24x16xf32>
    %cst_48 = arith.constant 0.00999999977 : f32
    %180 = vector.broadcast %cst_48 : f32 to vector<24x16xf32>
    %181 = arith.mulf %180, %179 : vector<24x16xf32>
    %182 = arith.maximumf %179, %181 : vector<24x16xf32>
    %183 = tpu.concatenate %182, %173, %157 in 1 : vector<24x16xf32>, vector<24x16xf32>, vector<24x16xf32> -> vector<24x48xf32>
    %c592 = arith.constant 592 : index
    %c0_49 = arith.constant 0 : index
    %184 = vector.load %arg4[%c592, %c0_49] : memref<648x128xf32, #tpu.memory_space<vmem>>, vector<48x5xf32>
    %cst_50 = arith.constant dense<0.000000e+00> : vector<24x5xf32>
    %185 = tpu.matmul %183, %184, %cst_50 {dimension_numbers = #tpu.dot_dimension_numbers<[1], [0], [0], [1], [0, 0, 1, 1], [], []>} : vector<24x48xf32>, vector<48x5xf32>, vector<24x5xf32> -> vector<24x5xf32>
    %c640 = arith.constant 640 : index
    %c0_51 = arith.constant 0 : index
    %186 = vector.load %arg4[%c640, %c0_51] : memref<648x128xf32, #tpu.memory_space<vmem>>, vector<1x5xf32>
    %187 = vector.broadcast %186 : vector<1x5xf32> to vector<24x5xf32>
    %188 = arith.addf %185, %187 : vector<24x5xf32>
    %cst_52 = arith.constant dense<0xFF800000> : vector<24xf32>
    %189 = vector.multi_reduction <maximumf>, %188, %cst_52 [1] : vector<24x5xf32> to vector<24xf32>
    %190 = vector.shape_cast %189 : vector<24xf32> to vector<24x1xf32>
    %191 = vector.broadcast %190 : vector<24x1xf32> to vector<24x5xf32>
    %192 = arith.subf %188, %191 : vector<24x5xf32>
    %193 = math.exp %192 : vector<24x5xf32>
    %cst_53 = arith.constant dense<0.000000e+00> : vector<24xf32>
    %194 = vector.multi_reduction <add>, %193, %cst_53 [1] : vector<24x5xf32> to vector<24xf32>
    %195 = vector.shape_cast %194 : vector<24xf32> to vector<24x1xf32>
    %196 = tpu.reciprocal %195 {approx = true} : vector<24x1xf32> -> vector<24x1xf32>
    %197 = vector.broadcast %196 : vector<24x1xf32> to vector<24x5xf32>
    %198 = arith.mulf %193, %197 : vector<24x5xf32>
    %c0_54 = arith.constant 0 : index
    %c0_55 = arith.constant 0 : index
    %c0_56 = arith.constant 0 : index
    %199 = vector.load %arg6[%c0_54, %c0_55, %c0_56] : memref<1x24x21xf32, #tpu.memory_space<vmem>>, vector<1x24x16xf32>
    %200 = vector.shape_cast %199 : vector<1x24x16xf32> to vector<24x16xf32>
    %201 = vector.shape_cast %106 : vector<24x16xf32> to vector<1x24x16xf32>
    tpu.vector_store %arg6[%c0_54, %c0_55, %c0_56], %201 {strides = array<i32>} : memref<1x24x21xf32, #tpu.memory_space<vmem>>, vector<1x24x16xf32>,
    %c0_57 = arith.constant 0 : index
    %c0_58 = arith.constant 0 : index
    %c16 = arith.constant 16 : index
    %202 = vector.load %arg6[%c0_57, %c0_58, %c16] : memref<1x24x21xf32, #tpu.memory_space<vmem>>, vector<1x24x5xf32>
    %203 = vector.shape_cast %202 : vector<1x24x5xf32> to vector<24x5xf32>
    %204 = vector.shape_cast %198 : vector<24x5xf32> to vector<1x24x5xf32>
    tpu.vector_store %arg6[%c0_57, %c0_58, %c16], %204 {strides = array<i32>} : memref<1x24x21xf32, #tpu.memory_space<vmem>>, vector<1x24x5xf32>,
    return
  }
  func.func @transform_0(%arg0: i32) -> (i32, i32, i32) {
    %c0_i32 = arith.constant 0 : i32
    %c0_i32_0 = arith.constant 0 : i32
    %c0_i32_1 = arith.constant 0 : i32
    return %arg0, %c0_i32, %c0_i32_0 : i32, i32, i32
  }
  func.func @transform_1(%arg0: i32) -> (i32, i32, i32) {
    %c0_i32 = arith.constant 0 : i32
    %c0_i32_0 = arith.constant 0 : i32
    %c0_i32_1 = arith.constant 0 : i32
    return %arg0, %c0_i32, %c0_i32_0 : i32, i32, i32
  }
  func.func @transform_2(%arg0: i32) -> (i32, i32, i32) {
    %c0_i32 = arith.constant 0 : i32
    %c0_i32_0 = arith.constant 0 : i32
    %c0_i32_1 = arith.constant 0 : i32
    return %arg0, %c0_i32, %c0_i32_0 : i32, i32, i32
  }
  func.func @transform_3(%arg0: i32) -> (i32, i32) {
    %c0_i32 = arith.constant 0 : i32
    %c0_i32_0 = arith.constant 0 : i32
    %c0_i32_1 = arith.constant 0 : i32
    return %c0_i32, %c0_i32_0 : i32, i32
  }
  func.func @transform_4(%arg0: i32) -> (i32, i32) {
    %c0_i32 = arith.constant 0 : i32
    %c0_i32_0 = arith.constant 0 : i32
    %c0_i32_1 = arith.constant 0 : i32
    return %c0_i32, %c0_i32_0 : i32, i32
  }
  func.func @transform_5(%arg0: i32) -> (i32, i32, i32) {
    %c0_i32 = arith.constant 0 : i32
    %c0_i32_0 = arith.constant 0 : i32
    %c0_i32_1 = arith.constant 0 : i32
    return %arg0, %c0_i32, %c0_i32_0 : i32, i32, i32
  }
}

</mosaic_0001>

<llo_original>
// kernel: sleepnet_forward_pallas.1
$region0: #{sleepnet_forward_pallas.1}
  #allocation0 [shape = 'u32[]', space=smem, size = 0x4, offset = 0x4, fixed_abs, tag = 'smem constant byte address 0x4 - core index']
  #allocation1 [shape = 'u32[144,128]{1,0:T(1,128)}', space=vmem, size = 0x12000, scoped, tag = 'internal scratch']
  %s0 = inlined_call_operand.vmem [shape: f32[2,24,128], index: 0, kind: input, shape index: {}]
  %s1 = inlined_call_operand.vmem [shape: f32[2,24,4], index: 1, kind: input, shape index: {}]
  %s2 = inlined_call_operand.vmem [shape: f32[2,24,1], index: 2, kind: input, shape index: {}]
  %s3 = inlined_call_operand.hbm [shape: f32[648,128], index: 3, kind: input, shape index: {}]
  %s4 = inlined_call_operand.vmem [shape: f32[24,4], index: 4, kind: input, shape index: {}]
  %s5 = inlined_call_operand.vmem [shape: f32[2,24,21], index: 5, kind: output, shape index: {}]
  %s6 = sld [smem:[#allocation0]]
  $region57: #{sleepnet_forward_pallas.1} parent=0
    _
  %s8 = ssub.s32 1, %s6
  %s9 = scalar_select 0, %s8, %s6
  $region1: #{sleepnet_forward_pallas.1} parent=0
    #allocation2 [shape = 'u8[331776]{0}', space=vmem, size = 0x51000, scoped, tag = 'input window, operand 3, single buffered']
    #allocation3 [shape = 's32[2]{0}', space=sflag, size = 0x8, scoped, tag = 'scoped memory for sleepnet_forward_pallas.1']
    %10 = vsyncpa [#allocation3], 0
    loop: start=0, step=1, limit=4
    $region2: #{sleepnet_forward_pallas.1} parent=1 // loop_pre_header
      _
    $region3: #{sleepnet_forward_pallas.1} parent=1 // loop_header
      %s12 = sphi 0, %s16
      %p13 = scmp.ge.s32.totalorder %s12, 4
      %s22 = sphi 0, %s24
      %s25 = sphi 0, %s22
      %s26 = sphi 0, %s25
      %s42 = sphi 0, %s26
      %s48 = sphi 0, %s50
      %s51 = sphi 0, %s48
      %s52 = sphi 0, %s51
      %s68 = sphi 0, %s52
      %s74 = sphi 0, %s76
      %s77 = sphi 0, %s74
      %s78 = sphi 0, %s77
      %s94 = sphi 0, %s78
      %s98 = sphi 0, %s98
      %s100 = sphi 0, %s98
      %s101 = sphi 0, %s100
      %s115 = sphi 0, %s101
      %s119 = sphi 0, %s119
      %s121 = sphi 0, %s119
      %s122 = sphi 0, %s121
      %s136 = sphi 0, %s122
      %s142 = sphi 0, %s144
      %s145 = sphi 0, %s142
      %s146 = sphi 0, %s145
      %s162 = sphi 0, %s146
    $region4: #{sleepnet_forward_pallas.1} parent=1 // loop_header_branch
      %15 = sbr.rel (%p13) target = $region8
    $region5: #{sleepnet_forward_pallas.1} parent=1 // loop_body
      %s17 = ssub.s32 %s12, 1
      %s18 = ssub.s32 %s12, 2
      %s19 = sadd.s32 %s12, 1
      %s20 = ssub.s32 %s12, %s19
      %p21 = scmp.eq.s32.totalorder %s20, 0
      %s23 = sadd.s32 %s22, 1
      %s24 = scalar_select %p21, %s22, %s23
      %p27 = pneg %p21
      %p28 = scmp.eq.s32.totalorder %s12, 1
      %p29 = por %p27, %p28
      %p30 = scmp.ne.s32.totalorder %s22, %s25
      %p31 = scmp.eq.s32.totalorder %s12, 0
      %p32 = por %p30, %p31
      %p33 = scmp.ne.s32.totalorder %s22, %s25
      %p34 = scmp.eq.s32.totalorder %s17, 1
      %p35 = por %p33, %p34
      %p36 = scmp.ne.s32.totalorder %s25, %s26
      %p37 = scmp.eq.s32.totalorder %s17, 0
      %p38 = por %p36, %p37
      %p39 = scmp.ne.s32.totalorder %s25, %s26
      %p40 = scmp.eq.s32.totalorder %s18, 1
      %p41 = por %p39, %p40
      %p43 = scmp.ne.s32.totalorder %s26, %s42
      %p44 = scmp.eq.s32.totalorder %s18, 0
      %p45 = por %p43, %p44
      %s46 = ssub.s32 %s12, %s19
      %p47 = scmp.eq.s32.totalorder %s46, 0
      %s49 = sadd.s32 %s48, 1
      %s50 = scalar_select %p47, %s48, %s49
      %p53 = pneg %p47
      %p54 = scmp.eq.s32.totalorder %s12, 1
      %p55 = por %p53, %p54
      %p56 = scmp.ne.s32.totalorder %s48, %s51
      %p57 = scmp.eq.s32.totalorder %s12, 0
      %p58 = por %p56, %p57
      %p59 = scmp.ne.s32.totalorder %s48, %s51
      %p60 = scmp.eq.s32.totalorder %s17, 1
      %p61 = por %p59, %p60
      %p62 = scmp.ne.s32.totalorder %s51, %s52
      %p63 = scmp.eq.s32.totalorder %s17, 0
      %p64 = por %p62, %p63
      %p65 = scmp.ne.s32.totalorder %s51, %s52
      %p66 = scmp.eq.s32.totalorder %s18, 1
      %p67 = por %p65, %p66
      %p69 = scmp.ne.s32.totalorder %s52, %s68
      %p70 = scmp.eq.s32.totalorder %s18, 0
      %p71 = por %p69, %p70
      %s72 = ssub.s32 %s12, %s19
      %p73 = scmp.eq.s32.totalorder %s72, 0
      %s75 = sadd.s32 %s74, 1
      %s76 = scalar_select %p73, %s74, %s75
      %p79 = pneg %p73
      %p80 = scmp.eq.s32.totalorder %s12, 1
      %p81 = por %p79, %p80
      %p82 = scmp.ne.s32.totalorder %s74, %s77
      %p83 = scmp.eq.s32.totalorder %s12, 0
      %p84 = por %p82, %p83
      %p85 = scmp.ne.s32.totalorder %s74, %s77
      %p86 = scmp.eq.s32.totalorder %s17, 1
      %p87 = por %p85, %p86
      %p88 = scmp.ne.s32.totalorder %s77, %s78
      %p89 = scmp.eq.s32.totalorder %s17, 0
      %p90 = por %p88, %p89
      %p91 = scmp.ne.s32.totalorder %s77, %s78
      %p92 = scmp.eq.s32.totalorder %s18, 1
      %p93 = por %p91, %p92
      %p95 = scmp.ne.s32.totalorder %s78, %s94
      %p96 = scmp.eq.s32.totalorder %s18, 0
      %p97 = por %p95, %p96
      %s99 = sadd.s32 %s98, 1
      %p102 = scmp.eq.s32.totalorder %s12, 1
      %p103 = scmp.ne.s32.totalorder %s98, %s100
      %p104 = scmp.eq.s32.totalorder %s12, 0
      %p105 = por %p103, %p104
      %p106 = scmp.ne.s32.totalorder %s98, %s100
      %p107 = scmp.eq.s32.totalorder %s17, 1
      %p108 = por %p106, %p107
      %p109 = scmp.ne.s32.totalorder %s100, %s101
      %p110 = scmp.eq.s32.totalorder %s17, 0
      %p111 = por %p109, %p110
      %p112 = scmp.ne.s32.totalorder %s100, %s101
      %p113 = scmp.eq.s32.totalorder %s18, 1
      %p114 = por %p112, %p113
      %p116 = scmp.ne.s32.totalorder %s101, %s115
      %p117 = scmp.eq.s32.totalorder %s18, 0
      %p118 = por %p116, %p117
      %s120 = sadd.s32 %s119, 1
      %p123 = scmp.eq.s32.totalorder %s12, 1
      %p124 = scmp.ne.s32.totalorder %s119, %s121
      %p125 = scmp.eq.s32.totalorder %s12, 0
      %p126 = por %p124, %p125
      %p127 = scmp.ne.s32.totalorder %s119, %s121
      %p128 = scmp.eq.s32.totalorder %s17, 1
      %p129 = por %p127, %p128
      %p130 = scmp.ne.s32.totalorder %s121, %s122
      %p131 = scmp.eq.s32.totalorder %s17, 0
      %p132 = por %p130, %p131
      %p133 = scmp.ne.s32.totalorder %s121, %s122
      %p134 = scmp.eq.s32.totalorder %s18, 1
      %p135 = por %p133, %p134
      %p137 = scmp.ne.s32.totalorder %s122, %s136
      %p138 = scmp.eq.s32.totalorder %s18, 0
      %p139 = por %p137, %p138
      %s140 = ssub.s32 %s12, %s19
      %p141 = scmp.eq.s32.totalorder %s140, 0
      %s143 = sadd.s32 %s142, 1
      %s144 = scalar_select %p141, %s142, %s143
      %p147 = pneg %p141
      %p148 = scmp.eq.s32.totalorder %s12, 1
      %p149 = por %p147, %p148
      %p150 = scmp.ne.s32.totalorder %s142, %s145
      %p151 = scmp.eq.s32.totalorder %s12, 0
      %p152 = por %p150, %p151
      %p153 = scmp.ne.s32.totalorder %s142, %s145
      %p154 = scmp.eq.s32.totalorder %s17, 1
      %p155 = por %p153, %p154
      %p156 = scmp.ne.s32.totalorder %s145, %s146
      %p157 = scmp.eq.s32.totalorder %s17, 0
      %p158 = por %p156, %p157
      %p159 = scmp.ne.s32.totalorder %s145, %s146
      %p160 = scmp.eq.s32.totalorder %s18, 1
      %p161 = por %p159, %p160
      %p163 = scmp.ne.s32.totalorder %s146, %s162
      %p164 = scmp.eq.s32.totalorder %s18, 0
      %p165 = por %p163, %p164
      %p166 = scmp.le.s32.totalorder 1, %s12
      %p167 = scmp.lt.s32.totalorder %s12, 3
      %p168 = pnand %p166, %p167
      %p169 = pneg %p168
      // Predicated region
      $region9: #{sleepnet_forward_pallas.1} parent=5 // pred_check
        _
      $region10: #{sleepnet_forward_pallas.1} parent=5 // pred_check_branch
        %171 = sbr.rel (%p168) target = $region12
      $region11: #{sleepnet_forward_pallas.1} parent=5 // pred_region
        %s172 = ssub.s32 %s12, 1
        // Predicated region
        $region13: #{sleepnet_forward_pallas.1} parent=11 // pred_check
          %p173 = pneg %p111
        $region14: #{sleepnet_forward_pallas.1} parent=11 // pred_check_branch
          %175 = sbr.rel (%p173) target = $region16
        $region15: #{sleepnet_forward_pallas.1} parent=11 // pred_region
          %s177 = ssub.s32 10368, 10368
          %178 = vsyncadd [#allocation3], %s177
          %s179 = sshll.u32 [#allocation2], 4
          %s180 = int_to_ptr.vmem [resolvable:$true] %s179
          %185 = dma.hbm_to_vmem [thread:$0]  %s3, 10368, %s180, [#allocation3], 128, 128, 8
        $region16: #{sleepnet_forward_pallas.1} parent=11 // pred_fallthru
          _
        // Predicated region
        $region17: #{sleepnet_forward_pallas.1} parent=11 // pred_check
          %p186 = pneg %p132
        $region18: #{sleepnet_forward_pallas.1} parent=11 // pred_check_branch
          %188 = sbr.rel (%p186) target = $region20
        $region19: #{sleepnet_forward_pallas.1} parent=11 // pred_region
          _
        $region20: #{sleepnet_forward_pallas.1} parent=11 // pred_fallthru
          _
      $region12: #{sleepnet_forward_pallas.1} parent=5 // pred_fallthru
        _
      %p189 = scmp.lt.s32.totalorder %s12, 2
      // Predicated region
      $region21: #{sleepnet_forward_pallas.1} parent=5 // pred_check
        %p190 = pneg %p189
      $region22: #{sleepnet_forward_pallas.1} parent=5 // pred_check_branch
        %192 = sbr.rel (%p190) target = $region24
      $region23: #{sleepnet_forward_pallas.1} parent=5 // pred_region
        // Predicated region
        $region25: #{sleepnet_forward_pallas.1} parent=23 // pred_check
          %p193 = pneg %p32
        $region26: #{sleepnet_forward_pallas.1} parent=23 // pred_check_branch
          %195 = sbr.rel (%p193) target = $region28
        $region27: #{sleepnet_forward_pallas.1} parent=23 // pred_region
          %p196 = scmp.lt.s32.totalorder %s12, 1
          %s197 = scalar_select %p196, %s12, 1
          %s198 = smul.addr %s197, 3
          %s199 = smul.addr %s198, 8
          %s200 = scalar_lea.vmem %s0, %s199
        $region28: #{sleepnet_forward_pallas.1} parent=23 // pred_fallthru
          _
        // Predicated region
        $region29: #{sleepnet_forward_pallas.1} parent=23 // pred_check
          %p201 = pneg %p58
        $region30: #{sleepnet_forward_pallas.1} parent=23 // pred_check_branch
          %203 = sbr.rel (%p201) target = $region32
        $region31: #{sleepnet_forward_pallas.1} parent=23 // pred_region
          %p204 = scmp.lt.s32.totalorder %s12, 1
          %s205 = scalar_select %p204, %s12, 1
          %s206 = smul.addr %s205, 3
          %s207 = smul.addr %s206, 8
          %s208 = scalar_lea.vmem %s1, %s207
        $region32: #{sleepnet_forward_pallas.1} parent=23 // pred_fallthru
          _
        // Predicated region
        $region33: #{sleepnet_forward_pallas.1} parent=23 // pred_check
          %p209 = pneg %p84
        $region34: #{sleepnet_forward_pallas.1} parent=23 // pred_check_branch
          %211 = sbr.rel (%p209) target = $region36
        $region35: #{sleepnet_forward_pallas.1} parent=23 // pred_region
          %p212 = scmp.lt.s32.totalorder %s12, 1
          %s213 = scalar_select %p212, %s12, 1
          %s214 = smul.addr %s213, 3
          %s215 = smul.addr %s214, 8
          %s216 = scalar_lea.vmem %s2, %s215
        $region36: #{sleepnet_forward_pallas.1} parent=23 // pred_fallthru
          _
      $region24: #{sleepnet_forward_pallas.1} parent=5 // pred_fallthru
        _
      %p217 = scmp.le.s32.totalorder 1, %s12
      %p218 = scmp.lt.s32.totalorder %s12, 3
      %p219 = pnand %p217, %p218
      %p220 = pneg %p219
      // Predicated region
      $region37: #{sleepnet_forward_pallas.1} parent=5 // pred_check
        _
      $region38: #{sleepnet_forward_pallas.1} parent=5 // pred_check_branch
        %222 = sbr.rel (%p219) target = $region40
      $region39: #{sleepnet_forward_pallas.1} parent=5 // pred_region
        %s223 = ssub.s32 %s12, 1
        // Predicated region
        $region41: #{sleepnet_forward_pallas.1} parent=39 // pred_check
          %p224 = pneg %p111
        $region42: #{sleepnet_forward_pallas.1} parent=39 // pred_check_branch
          %226 = sbr.rel (%p224) target = $region44
        $region43: #{sleepnet_forward_pallas.1} parent=39 // pred_region
          %227 = dma.done [#allocation3], 10368
        $region44: #{sleepnet_forward_pallas.1} parent=39 // pred_fallthru
          _
        %p228 = scmp.lt.s32.totalorder %s17, 1
        %s229 = scalar_select %p228, %s17, 1
        %s230 = smul.addr %s229, 3
        %s231 = smul.addr %s230, 8
        %s232 = scalar_lea.vmem %s0, %s231
        %p233 = pneg %p38
        %p234 = pneg %p35
        %p235 = scmp.lt.s32.totalorder %s17, 1
        %s236 = scalar_select %p235, %s17, 1
        %s237 = smul.addr %s236, 3
        %s238 = smul.addr %s237, 8
        %s239 = scalar_lea.vmem %s1, %s238
        %p240 = pneg %p64
        %p241 = pneg %p61
        %p242 = scmp.lt.s32.totalorder %s17, 1
        %s243 = scalar_select %p242, %s17, 1
        %s244 = smul.addr %s243, 3
        %s245 = smul.addr %s244, 8
        %s246 = scalar_lea.vmem %s2, %s245
        %p247 = pneg %p90
        %p248 = pneg %p87
        %p249 = pneg %p111
        %p250 = pneg %p108
        %p251 = pneg %p132
        %p252 = pneg %p129
        %p253 = pneg %p158
        %p254 = pneg %p155
        %p255 = scmp.lt.s32.totalorder %s17, 1
        %s256 = scalar_select %p255, %s17, 1
        %s257 = smul.addr %s256, 3
        %s258 = smul.addr %s257, 8
        %s259 = scalar_lea.vmem %s5, %s258
        %p260 = scmp.lt.s32.totalorder %s17, 1
        %s261 = scalar_select %p260, %s17, 1
        %s262 = smul.addr %s261, 3
        %s263 = smul.addr %s262, 8
        %s264 = scalar_lea.vmem %s0, %s263
        %p265 = scmp.lt.s32.totalorder %s17, 1
        %s266 = scalar_select %p265, %s17, 1
        %s267 = smul.addr %s266, 3
        %s268 = smul.addr %s267, 8
        %s269 = scalar_lea.vmem %s1, %s268
        %p270 = scmp.lt.s32.totalorder %s17, 1
        %s271 = scalar_select %p270, %s17, 1
        %s272 = smul.addr %s271, 3
        %s273 = smul.addr %s272, 8
        %s274 = scalar_lea.vmem %s2, %s273
        %p275 = scmp.lt.s32.totalorder %s17, 1
        %s276 = scalar_select %p275, %s17, 1
        %s277 = smul.addr %s276, 3
        %s278 = smul.addr %s277, 8
        %s279 = scalar_lea.vmem %s5, %s278
        %v280 = vld [vmem:[%s264] sm:$0xff]
        %v281 = vld [vmem:[%s264 + $0x8] sm:$0xff]
        %v282 = vld [vmem:[%s264 + $0x10] sm:$0xff]
        %v283 = vld [vmem:[#allocation2] sm:$0xff]
        %v284 = vld [vmem:[#allocation2 + $0x8] sm:$0xff]
        %v285 = vld [vmem:[#allocation2 + $0x10] sm:$0xff]
        %v286 = vld [vmem:[#allocation2 + $0x18] sm:$0xff]
        %v287 = vld [vmem:[#allocation2 + $0x20] sm:$0xff]
        %v288 = vld [vmem:[#allocation2 + $0x28] sm:$0xff]
        %v289 = vld [vmem:[#allocation2 + $0x30] sm:$0xff]
        %v290 = vld [vmem:[#allocation2 + $0x38] sm:$0xff]
        %v291 = vld [vmem:[#allocation2 + $0x40] sm:$0xff]
        %v292 = vld [vmem:[#allocation2 + $0x48] sm:$0xff]
        %v293 = vld [vmem:[#allocation2 + $0x50] sm:$0xff]
        %v294 = vld [vmem:[#allocation2 + $0x58] sm:$0xff]
        %v295 = vld [vmem:[#allocation2 + $0x60] sm:$0xff]
        %v296 = vld [vmem:[#allocation2 + $0x68] sm:$0xff]
        %v297 = vld [vmem:[#allocation2 + $0x70] sm:$0xff]
        %v298 = vld [vmem:[#allocation2 + $0x78] sm:$0xff]
        %v299 = vld [vmem:[#allocation2 + $0x80] sm:$0x1]
        %v300 = vlaneseq
        %v301 = vshrl.u32 %v300, 7
        %v302 = vsub.s32 0, %v301
        %v303 = vrot.slane %v299, %v302
        %304 = vmatprep.subr.mxu0 0.0
        %305 = vmatpush1.msra.mxu0 %v283
        %306 = vmatprep.subr.mxu0 0.0
        %307 = vmatpush1.msra.mxu0 %v284
        %308 = vmatprep.subr.mxu0 0.0
        %309 = vmatpush1.msra.mxu0 %v285
        %310 = vmatprep.subr.mxu0 0.0
        %311 = vmatpush1.msra.mxu0 %v286
        %312 = vmatprep.subr.mxu0 0.0
        %313 = vmatpush1.msra.mxu0 %v287
        %314 = vmatprep.subr.mxu0 0.0
        %315 = vmatpush1.msra.mxu0 %v288
        %316 = vmatprep.subr.mxu0 0.0
        %317 = vmatpush1.msra.mxu0 %v289
        %318 = vmatprep.subr.mxu0 0.0
        %319 = vmatpush1.msra.mxu0 %v290
        %320 = vmatprep.subr.mxu0 0.0
        %321 = vmatpush1.msra.mxu0 %v291
        %322 = vmatprep.subr.mxu0 0.0
        %323 = vmatpush1.msra.mxu0 %v292
        %324 = vmatprep.subr.mxu0 0.0
        %325 = vmatpush1.msra.mxu0 %v293
        %326 = vmatprep.subr.mxu0 0.0
        %327 = vmatpush1.msra.mxu0 %v294
        %328 = vmatprep.subr.mxu0 0.0
        %329 = vmatpush1.msra.mxu0 %v295
        %330 = vmatprep.subr.mxu0 0.0
        %331 = vmatpush1.msra.mxu0 %v296
        %332 = vmatprep.subr.mxu0 0.0
        %333 = vmatpush1.msra.mxu0 %v297
        %334 = vmatprep.subr.mxu0 0.0
        %335 = vmatpush1.msra.mxu0 %v298
        %336 = vmatprep.subr.mxu0 0.0
        %337 = vmatpush1.msra.mxu0 0.0
        %338 = vmatprep.subr.mxu0 0.0
        %339 = vmatpush1.msra.mxu0 0.0
        %340 = vmatprep.subr.mxu0 0.0
        %341 = vmatpush1.msra.mxu0 0.0
        %342 = vmatprep.subr.mxu0 0.0
        %343 = vmatpush1.msra.mxu0 0.0
        %344 = vmatprep.subr.mxu0 0.0
        %345 = vmatpush1.msra.mxu0 0.0
        %346 = vmatprep.subr.mxu0 0.0
        %347 = vmatpush1.msra.mxu0 0.0
        %348 = vmatprep.subr.mxu0 0.0
        %349 = vmatpush1.msra.mxu0 0.0
        %350 = vmatprep.subr.mxu0 0.0
        %351 = vmatpush1.msra.mxu0 0.0
        %352 = vmatprep.subr.mxu0 0.0
        %353 = vmatpush1.msra.mxu0 0.0
        %354 = vmatprep.subr.mxu0 0.0
        %355 = vmatpush1.msra.mxu0 0.0
        %356 = vmatprep.subr.mxu0 0.0
        %357 = vmatpush1.msra.mxu0 0.0
        %358 = vmatprep.subr.mxu0 0.0
        %359 = vmatpush1.msra.mxu0 0.0
        %360 = vmatprep.subr.mxu0 0.0
        %361 = vmatpush1.msra.mxu0 0.0
        %362 = vmatprep.subr.mxu0 0.0
        %363 = vmatpush1.msra.mxu0 0.0
        %364 = vmatprep.subr.mxu0 0.0
        %365 = vmatpush1.msra.mxu0 0.0
        %366 = vmatprep.subr.mxu0 0.0
        %367 = vmatpush1.msra.mxu0 0.0
        %368 = vmatprep.mubr.f32.mxu0 0.0
        %369 = vmatmul.mubr.f32.gmra.mrb[0].mxu0 %v280
        %v370 = vpop.f32.mrb[0].mxu0
        %v371 = vadd.f32 %v303, %v370
        %v372 = vpop.f32.mrb[0].mxu0
        %373 = vmatprep.mubr.f32.mxu0 0.0
        %374 = vmatmul.mubr.f32.gmra.mrb[0].mxu0 %v281
        %v375 = vpop.f32.mrb[0].mxu0
        %v376 = vadd.f32 %v303, %v375
        %v377 = vpop.f32.mrb[0].mxu0
        %378 = vmatprep.mubr.f32.mxu0 0.0
        %379 = vmatmul.mubr.f32.gmra.mrb[0].mxu0 %v282
        %v380 = vpop.f32.mrb[0].mxu0
        %v381 = vadd.f32 %v303, %v380
        %v382 = vpop.f32.mrb[0].mxu0
        %383 = vdwg.mxu0
        %v384 = vmul.f32 %v371, 0.01
        %v385 = vmul.f32 %v376, 0.01
        %v386 = vmul.f32 %v381, 0.01
        %v387 = vmax.f32 %v371, %v384
        %v388 = vmax.f32 %v376, %v385
        %v389 = vmax.f32 %v381, %v386
        %v390 = vld [vmem:[#allocation2 + $0x88] sm:$0xff]
        %v391 = vld [vmem:[#allocation2 + $0x90] sm:$0xff]
        %v392 = vld [vmem:[#allocation2 + $0x98] sm:$0xff]
        %v393 = vld [vmem:[#allocation2 + $0xa0] sm:$0xff]
        %v394 = vld [vmem:[#allocation2 + $0xa8] sm:$0xff]
        %v395 = vld [vmem:[#allocation2 + $0xb0] sm:$0xff]
        %v396 = vld [vmem:[#allocation2 + $0xb8] sm:$0xff]
        %v397 = vld [vmem:[#allocation2 + $0xc0] sm:$0xff]
        %v398 = vld [vmem:[#allocation2 + $0xc8] sm:$0xff]
        %v399 = vld [vmem:[#allocation2 + $0xd0] sm:$0xff]
        %v400 = vld [vmem:[#allocation2 + $0xd8] sm:$0xff]
        %v401 = vld [vmem:[#allocation2 + $0xe0] sm:$0xff]
        %v402 = vld [vmem:[#allocation2 + $0xe8] sm:$0xff]
        %v403 = vld [vmem:[#allocation2 + $0xf0] sm:$0xff]
        %v404 = vld [vmem:[#allocation2 + $0xf8] sm:$0xff]
        %v405 = vld [vmem:[#allocation2 + $0x100] sm:$0xf]
        %v406 = vld [vmem:[#allocation2 + $0x108] sm:$0x1]
        %v407 = vlaneseq
        %v408 = vshrl.u32 %v407, 7
        %v409 = vsub.s32 0, %v408
        %v410 = vrot.slane %v406, %v409
        %vm411 = vcmask 1014784
        %v413 = vsel %vm411, %v387, 0
        %v416 = vsel %vm411, %v388, 0
        %v419 = vsel %vm411, %v389, 0
        %vm421 = vcmask 1043456
        %v423 = vsel %vm421, %v405, 0
        %425 = vmatprep.subr.mxu0 0.0
        %426 = vmatpush1.msra.mxu0 %v390
        %427 = vmatprep.subr.mxu0 0.0
        %428 = vmatpush1.msra.mxu0 %v391
        %429 = vmatprep.subr.mxu0 0.0
        %430 = vmatpush1.msra.mxu0 %v392
        %431 = vmatprep.subr.mxu0 0.0
        %432 = vmatpush1.msra.mxu0 %v393
        %433 = vmatprep.subr.mxu0 0.0
        %434 = vmatpush1.msra.mxu0 %v394
        %435 = vmatprep.subr.mxu0 0.0
        %436 = vmatpush1.msra.mxu0 %v395
        %437 = vmatprep.subr.mxu0 0.0
        %438 = vmatpush1.msra.mxu0 %v396
        %439 = vmatprep.subr.mxu0 0.0
        %440 = vmatpush1.msra.mxu0 %v397
        %441 = vmatprep.subr.mxu0 0.0
        %442 = vmatpush1.msra.mxu0 %v398
        %443 = vmatprep.subr.mxu0 0.0
        %444 = vmatpush1.msra.mxu0 %v399
        %445 = vmatprep.subr.mxu0 0.0
        %446 = vmatpush1.msra.mxu0 %v400
        %447 = vmatprep.subr.mxu0 0.0
        %448 = vmatpush1.msra.mxu0 %v401
        %449 = vmatprep.subr.mxu0 0.0
        %450 = vmatpush1.msra.mxu0 %v402
        %451 = vmatprep.subr.mxu0 0.0
        %452 = vmatpush1.msra.mxu0 %v403
        %453 = vmatprep.subr.mxu0 0.0
        %454 = vmatpush1.msra.mxu0 %v404
        %455 = vmatprep.subr.mxu0 0.0
        %456 = vmatpush1.msra.mxu0 %v423
        %457 = vmatprep.subr.mxu0 0.0
        %458 = vmatpush1.msra.mxu0 0.0
        %459 = vmatprep.subr.mxu0 0.0
        %460 = vmatpush1.msra.mxu0 0.0
        %461 = vmatprep.subr.mxu0 0.0
        %462 = vmatpush1.msra.mxu0 0.0
        %463 = vmatprep.subr.mxu0 0.0
        %464 = vmatpush1.msra.mxu0 0.0
        %465 = vmatprep.subr.mxu0 0.0
        %466 = vmatpush1.msra.mxu0 0.0
        %467 = vmatprep.subr.mxu0 0.0
        %468 = vmatpush1.msra.mxu0 0.0
        %469 = vmatprep.subr.mxu0 0.0
        %470 = vmatpush1.msra.mxu0 0.0
        %471 = vmatprep.subr.mxu0 0.0
        %472 = vmatpush1.msra.mxu0 0.0
        %473 = vmatprep.subr.mxu0 0.0
        %474 = vmatpush1.msra.mxu0 0.0
        %475 = vmatprep.subr.mxu0 0.0
        %476 = vmatpush1.msra.mxu0 0.0
        %477 = vmatprep.subr.mxu0 0.0
        %478 = vmatpush1.msra.mxu0 0.0
        %479 = vmatprep.subr.mxu0 0.0
        %480 = vmatpush1.msra.mxu0 0.0
        %481 = vmatprep.subr.mxu0 0.0
        %482 = vmatpush1.msra.mxu0 0.0
        %483 = vmatprep.subr.mxu0 0.0
        %484 = vmatpush1.msra.mxu0 0.0
        %485 = vmatprep.subr.mxu0 0.0
        %486 = vmatpush1.msra.mxu0 0.0
        %487 = vmatprep.subr.mxu0 0.0
        %488 = vmatpush1.msra.mxu0 0.0
        %489 = vmatprep.mubr.f32.mxu0 0.0
        %490 = vmatmul.mubr.f32.gmra.mrb[0].mxu0 %v413
        %v491 = vpop.f32.mrb[0].mxu0
        %v492 = vadd.f32 %v410, %v491
        %v493 = vpop.f32.mrb[0].mxu0
        %494 = vmatprep.mubr.f32.mxu0 0.0
        %495 = vmatmul.mubr.f32.gmra.mrb[0].mxu0 %v416
        %v496 = vpop.f32.mrb[0].mxu0
        %v497 = vadd.f32 %v410, %v496
        %v498 = vpop.f32.mrb[0].mxu0
        %499 = vmatprep.mubr.f32.mxu0 0.0
        %500 = vmatmul.mubr.f32.gmra.mrb[0].mxu0 %v419
        %v501 = vpop.f32.mrb[0].mxu0
        %v502 = vadd.f32 %v410, %v501
        %v503 = vpop.f32.mrb[0].mxu0
        %504 = vdwg.mxu0
        %508 = vrot.lane.b32.xlu0 %v492, 124
        %v509 = vpop.permute.xlu0 %508
        %510 = vrot.lane.b32.xlu0 %v497, 124
        %v511 = vpop.permute.xlu0 %510
        %512 = vrot.lane.b32.xlu0 %v502, 124
        %v513 = vpop.permute.xlu0 %512
        %v517 = vmax.f32 %v492, %v509
        %v518 = vmax.f32 %v497, %v511
        %v519 = vmax.f32 %v502, %v513
        %520 = vrot.lane.b32.xlu0 %v492, 120
        %v521 = vpop.permute.xlu0 %520
        %522 = vrot.lane.b32.xlu0 %v497, 120
        %v523 = vpop.permute.xlu0 %522
        %524 = vrot.lane.b32.xlu0 %v502, 120
        %v525 = vpop.permute.xlu0 %524
        %v529 = vmax.f32 %v517, %v521
        %v530 = vmax.f32 %v518, %v523
        %v531 = vmax.f32 %v519, %v525
        %532 = vrot.lane.b32.xlu0 %v492, 116
        %v533 = vpop.permute.xlu0 %532
        %534 = vrot.lane.b32.xlu0 %v497, 116
        %v535 = vpop.permute.xlu0 %534
        %536 = vrot.lane.b32.xlu0 %v502, 116
        %v537 = vpop.permute.xlu0 %536
        %v541 = vmax.f32 %v529, %v533
        %v542 = vmax.f32 %v530, %v535
        %v543 = vmax.f32 %v531, %v537
        %544 = vrot.lane.b32.xlu0 %v492, 112
        %v545 = vpop.permute.xlu0 %544
        %546 = vrot.lane.b32.xlu0 %v497, 112
        %v547 = vpop.permute.xlu0 %546
        %548 = vrot.lane.b32.xlu0 %v502, 112
        %v549 = vpop.permute.xlu0 %548
        %v553 = vmax.f32 %v541, %v545
        %v554 = vmax.f32 %v542, %v547
        %v555 = vmax.f32 %v543, %v549
        %556 = vrot.lane.b32.xlu0 %v492, 108
        %v557 = vpop.permute.xlu0 %556
        %558 = vrot.lane.b32.xlu0 %v497, 108
        %v559 = vpop.permute.xlu0 %558
        %560 = vrot.lane.b32.xlu0 %v502, 108
        %v561 = vpop.permute.xlu0 %560
        %v565 = vmax.f32 %v553, %v557
        %v566 = vmax.f32 %v554, %v559
        %v567 = vmax.f32 %v555, %v561
        %571 = vrot.lane.b32.xlu0 %v565, 120
        %v572 = vpop.permute.xlu0 %571
        %573 = vrot.lane.b32.xlu0 %v566, 120
        %v574 = vpop.permute.xlu0 %573
        %575 = vrot.lane.b32.xlu0 %v567, 120
        %v576 = vpop.permute.xlu0 %575
        %580 = vrot.lane.b32.xlu0 %v565, 112
        %v581 = vpop.permute.xlu0 %580
        %582 = vrot.lane.b32.xlu0 %v566, 112
        %v583 = vpop.permute.xlu0 %582
        %584 = vrot.lane.b32.xlu0 %v567, 112
        %v585 = vpop.permute.xlu0 %584
        %589 = vrot.lane.b32.xlu0 %v565, 104
        %v590 = vpop.permute.xlu0 %589
        %591 = vrot.lane.b32.xlu0 %v566, 104
        %v592 = vpop.permute.xlu0 %591
        %593 = vrot.lane.b32.xlu0 %v567, 104
        %v594 = vpop.permute.xlu0 %593
        %vm598 = vcmask 31744
        %v599 = vsel %vm598, %v565, %v572
        %v600 = vsel %vm598, %v566, %v574
        %v601 = vsel %vm598, %v567, %v576
        %vm602 = vcmask 64512
        %v603 = vsel %vm602, %v599, %v581
        %v604 = vsel %vm602, %v600, %v583
        %v605 = vsel %vm602, %v601, %v585
        %vm606 = vcmask 97280
        %v607 = vsel %vm606, %v603, %v590
        %v608 = vsel %vm606, %v604, %v592
        %v609 = vsel %vm606, %v605, %v594
        %v610 = vld [vmem:[%s269] sm:$0xff]
        %v611 = vld [vmem:[%s269 + $0x8] sm:$0xff]
        %v612 = vld [vmem:[%s269 + $0x10] sm:$0xff]
        %613 = vrot.lane.b32.xlu0 %v492, 4
        %v614 = vpop.permute.xlu0 %613
        %615 = vrot.lane.b32.xlu0 %v497, 4
        %v616 = vpop.permute.xlu0 %615
        %617 = vrot.lane.b32.xlu0 %v502, 4
        %v618 = vpop.permute.xlu0 %617
        %625 = vrot.lane.b32.xlu0 %v607, 64
        %v626 = vpop.permute.xlu0 %625
        %627 = vrot.lane.b32.xlu0 %v608, 64
        %v628 = vpop.permute.xlu0 %627
        %629 = vrot.lane.b32.xlu0 %v609, 64
        %v630 = vpop.permute.xlu0 %629
        %v634 = vsel %vm598, %v610, %v614
        %v635 = vsel %vm598, %v611, %v616
        %v636 = vsel %vm598, %v612, %v618
        %vm637 = vcmask 523264
        %v638 = vsel %vm637, %v634, %v626
        %v639 = vsel %vm637, %v635, %v628
        %v640 = vsel %vm637, %v636, %v630
        %v641 = vld [vmem:[#allocation2 + $0x110] sm:$0xff]
        %v642 = vld [vmem:[#allocation2 + $0x118] sm:$0xff]
        %v643 = vld [vmem:[#allocation2 + $0x120] sm:$0xff]
        %v644 = vld [vmem:[#allocation2 + $0x128] sm:$0xff]
        %v645 = vld [vmem:[#allocation2 + $0x130] sm:$0xff]
        %v646 = vld [vmem:[#allocation2 + $0x138] sm:$0xff]
        %v647 = vld [vmem:[#allocation2 + $0x140] sm:$0xff]
        %v648 = vld [vmem:[#allocation2 + $0x148] sm:$0xff]
        %v649 = vld [vmem:[#allocation2 + $0x150] sm:$0xff]
        %v650 = vld [vmem:[#allocation2 + $0x158] sm:$0xff]
        %v651 = vld [vmem:[#allocation2 + $0x160] sm:$0x1]
        %v652 = vlaneseq
        %v653 = vshrl.u32 %v652, 7
        %v654 = vsub.s32 0, %v653
        %v655 = vrot.slane %v651, %v654
        %vm656 = vcmask 654336
        %v658 = vsel %vm656, %v638, 0
        %v661 = vsel %vm656, %v639, 0
        %v664 = vsel %vm656, %v640, 0
        %666 = vmatprep.subr.mxu0 0.0
        %667 = vmatpush1.msra.mxu0 %v641
        %668 = vmatprep.subr.mxu0 0.0
        %669 = vmatpush1.msra.mxu0 %v642
        %670 = vmatprep.subr.mxu0 0.0
        %671 = vmatpush1.msra.mxu0 %v643
        %672 = vmatprep.subr.mxu0 0.0
        %673 = vmatpush1.msra.mxu0 %v644
        %674 = vmatprep.subr.mxu0 0.0
        %675 = vmatpush1.msra.mxu0 %v645
        %676 = vmatprep.subr.mxu0 0.0
        %677 = vmatpush1.msra.mxu0 %v646
        %678 = vmatprep.subr.mxu0 0.0
        %679 = vmatpush1.msra.mxu0 %v647
        %680 = vmatprep.subr.mxu0 0.0
        %681 = vmatpush1.msra.mxu0 %v648
        %682 = vmatprep.subr.mxu0 0.0
        %683 = vmatpush1.msra.mxu0 %v649
        %684 = vmatprep.subr.mxu0 0.0
        %685 = vmatpush1.msra.mxu0 %v650
        %686 = vmatprep.subr.mxu0 0.0
        %687 = vmatpush1.msra.mxu0 0.0
        %688 = vmatprep.subr.mxu0 0.0
        %689 = vmatpush1.msra.mxu0 0.0
        %690 = vmatprep.subr.mxu0 0.0
        %691 = vmatpush1.msra.mxu0 0.0
        %692 = vmatprep.subr.mxu0 0.0
        %693 = vmatpush1.msra.mxu0 0.0
        %694 = vmatprep.subr.mxu0 0.0
        %695 = vmatpush1.msra.mxu0 0.0
        %696 = vmatprep.subr.mxu0 0.0
        %697 = vmatpush1.msra.mxu0 0.0
        %698 = vmatprep.subr.mxu0 0.0
        %699 = vmatpush1.msra.mxu0 0.0
        %700 = vmatprep.subr.mxu0 0.0
        %701 = vmatpush1.msra.mxu0 0.0
        %702 = vmatprep.subr.mxu0 0.0
        %703 = vmatpush1.msra.mxu0 0.0
        %704 = vmatprep.subr.mxu0 0.0
        %705 = vmatpush1.msra.mxu0 0.0
        %706 = vmatprep.subr.mxu0 0.0
        %707 = vmatpush1.msra.mxu0 0.0
        %708 = vmatprep.subr.mxu0 0.0
        %709 = vmatpush1.msra.mxu0 0.0
        %710 = vmatprep.subr.mxu0 0.0
        %711 = vmatpush1.msra.mxu0 0.0
        %712 = vmatprep.subr.mxu0 0.0
        %713 = vmatpush1.msra.mxu0 0.0
        %714 = vmatprep.subr.mxu0 0.0
        %715 = vmatpush1.msra.mxu0 0.0
        %716 = vmatprep.subr.mxu0 0.0
        %717 = vmatpush1.msra.mxu0 0.0
        %718 = vmatprep.subr.mxu0 0.0
        %719 = vmatpush1.msra.mxu0 0.0
        %720 = vmatprep.subr.mxu0 0.0
        %721 = vmatpush1.msra.mxu0 0.0
        %722 = vmatprep.subr.mxu0 0.0
        %723 = vmatpush1.msra.mxu0 0.0
        %724 = vmatprep.subr.mxu0 0.0
        %725 = vmatpush1.msra.mxu0 0.0
        %726 = vmatprep.subr.mxu0 0.0
        %727 = vmatpush1.msra.mxu0 0.0
        %728 = vmatprep.subr.mxu0 0.0
        %729 = vmatpush1.msra.mxu0 0.0
        %730 = vmatprep.mubr.f32.mxu0 0.0
        %731 = vmatmul.mubr.f32.gmra.mrb[0].mxu0 %v658
        %v732 = vpop.f32.mrb[0].mxu0
        %v733 = vadd.f32 %v655, %v732
        %v734 = vpop.f32.mrb[0].mxu0
        %735 = vmatprep.mubr.f32.mxu0 0.0
        %736 = vmatmul.mubr.f32.gmra.mrb[0].mxu0 %v661
        %v737 = vpop.f32.mrb[0].mxu0
        %v738 = vadd.f32 %v655, %v737
        %v739 = vpop.f32.mrb[0].mxu0
        %740 = vmatprep.mubr.f32.mxu0 0.0
        %741 = vmatmul.mubr.f32.gmra.mrb[0].mxu0 %v664
        %v742 = vpop.f32.mrb[0].mxu0
        %v743 = vadd.f32 %v655, %v742
        %v744 = vpop.f32.mrb[0].mxu0
        %745 = vdwg.mxu0
        %v746 = vld [vmem:[#allocation2 + $0x168] sm:$0x3]
        %v747 = vlaneseq
        %v748 = vshrl.u32 %v747, 7
        %v749 = vsub.s32 0, %v748
        %v750 = vrot.slane %v746, %v749
        %v751 = vmul.f32 %v733, %v750
        %v752 = vmul.f32 %v738, %v750
        %v753 = vmul.f32 %v743, %v750
        %v754 = vlaneseq
        %v755 = vshrl.u32 %v754, 7
        %v756 = vsub.s32 1, %v755
        %v757 = vrot.slane %v746, %v756
        %v758 = vadd.f32 %v751, %v757
        %v759 = vadd.f32 %v752, %v757
        %v760 = vadd.f32 %v753, %v757
        %v761 = vmul.f32 %v758, 0.01
        %v762 = vmul.f32 %v759, 0.01
        %v763 = vmul.f32 %v760, 0.01
        %v764 = vmax.f32 %v758, %v761
        %v765 = vmax.f32 %v759, %v762
        %v766 = vmax.f32 %v760, %v763
        %770 = vrot.lane.b32.xlu0 %v733, 12
        %v771 = vpop.permute.xlu0 %770
        %772 = vrot.lane.b32.xlu0 %v738, 12
        %v773 = vpop.permute.xlu0 %772
        %774 = vrot.lane.b32.xlu0 %v743, 12
        %v775 = vpop.permute.xlu0 %774
        %v779 = vsel %vm606, %v764, %v771
        %v780 = vsel %vm606, %v765, %v773
        %v781 = vsel %vm606, %v766, %v775
        %v782 = vld [vmem:[#allocation2 + $0x170] sm:$0xff]
        %v783 = vld [vmem:[#allocation2 + $0x178] sm:$0xff]
        %v784 = vld [vmem:[#allocation2 + $0x180] sm:$0xff]
        %v785 = vld [vmem:[#allocation2 + $0x188] sm:$0x1]
        %v786 = vlaneseq
        %v787 = vshrl.u32 %v786, 7
        %v788 = vsub.s32 0, %v787
        %v789 = vrot.slane %v785, %v788
        %vm790 = vcmask 195584
        %v792 = vsel %vm790, %v779, 0
        %v795 = vsel %vm790, %v780, 0
        %v798 = vsel %vm790, %v781, 0
        %800 = vmatprep.subr.mxu0 0.0
        %801 = vmatpush1.msra.mxu0 %v782
        %802 = vmatprep.subr.mxu0 0.0
        %803 = vmatpush1.msra.mxu0 %v783
        %804 = vmatprep.subr.mxu0 0.0
        %805 = vmatpush1.msra.mxu0 %v784
        %806 = vmatprep.subr.mxu0 0.0
        %807 = vmatpush1.msra.mxu0 0.0
        %808 = vmatprep.subr.mxu0 0.0
        %809 = vmatpush1.msra.mxu0 0.0
        %810 = vmatprep.subr.mxu0 0.0
        %811 = vmatpush1.msra.mxu0 0.0
        %812 = vmatprep.subr.mxu0 0.0
        %813 = vmatpush1.msra.mxu0 0.0
        %814 = vmatprep.subr.mxu0 0.0
        %815 = vmatpush1.msra.mxu0 0.0
        %816 = vmatprep.subr.mxu0 0.0
        %817 = vmatpush1.msra.mxu0 0.0
        %818 = vmatprep.subr.mxu0 0.0
        %819 = vmatpush1.msra.mxu0 0.0
        %820 = vmatprep.subr.mxu0 0.0
        %821 = vmatpush1.msra.mxu0 0.0
        %822 = vmatprep.subr.mxu0 0.0
        %823 = vmatpush1.msra.mxu0 0.0
        %824 = vmatprep.subr.mxu0 0.0
        %825 = vmatpush1.msra.mxu0 0.0
        %826 = vmatprep.subr.mxu0 0.0
        %827 = vmatpush1.msra.mxu0 0.0
        %828 = vmatprep.subr.mxu0 0.0
        %829 = vmatpush1.msra.mxu0 0.0
        %830 = vmatprep.subr.mxu0 0.0
        %831 = vmatpush1.msra.mxu0 0.0
        %832 = vmatprep.subr.mxu0 0.0
        %833 = vmatpush1.msra.mxu0 0.0
        %834 = vmatprep.subr.mxu0 0.0
        %835 = vmatpush1.msra.mxu0 0.0
        %836 = vmatprep.subr.mxu0 0.0
        %837 = vmatpush1.msra.mxu0 0.0
        %838 = vmatprep.subr.mxu0 0.0
        %839 = vmatpush1.msra.mxu0 0.0
        %840 = vmatprep.subr.mxu0 0.0
        %841 = vmatpush1.msra.mxu0 0.0
        %842 = vmatprep.subr.mxu0 0.0
        %843 = vmatpush1.msra.mxu0 0.0
        %844 = vmatprep.subr.mxu0 0.0
        %845 = vmatpush1.msra.mxu0 0.0
        %846 = vmatprep.subr.mxu0 0.0
        %847 = vmatpush1.msra.mxu0 0.0
        %848 = vmatprep.subr.mxu0 0.0
        %849 = vmatpush1.msra.mxu0 0.0
        %850 = vmatprep.subr.mxu0 0.0
        %851 = vmatpush1.msra.mxu0 0.0
        %852 = vmatprep.subr.mxu0 0.0
        %853 = vmatpush1.msra.mxu0 0.0
        %854 = vmatprep.subr.mxu0 0.0
        %855 = vmatpush1.msra.mxu0 0.0
        %856 = vmatprep.subr.mxu0 0.0
        %857 = vmatpush1.msra.mxu0 0.0
        %858 = vmatprep.subr.mxu0 0.0
        %859 = vmatpush1.msra.mxu0 0.0
        %860 = vmatprep.subr.mxu0 0.0
        %861 = vmatpush1.msra.mxu0 0.0
        %862 = vmatprep.subr.mxu0 0.0
        %863 = vmatpush1.msra.mxu0 0.0
        %864 = vmatprep.mubr.f32.mxu0 0.0
        %865 = vmatmul.mubr.f32.gmra.mrb[0].mxu0 %v792
        %v866 = vpop.f32.mrb[0].mxu0
        %v867 = vadd.f32 %v789, %v866
        %v868 = vpop.f32.mrb[0].mxu0
        %869 = vmatprep.mubr.f32.mxu0 0.0
        %870 = vmatmul.mubr.f32.gmra.mrb[0].mxu0 %v795
        %v871 = vpop.f32.mrb[0].mxu0
        %v872 = vadd.f32 %v789, %v871
        %v873 = vpop.f32.mrb[0].mxu0
        %874 = vmatprep.mubr.f32.mxu0 0.0
        %875 = vmatmul.mubr.f32.gmra.mrb[0].mxu0 %v798
        %v876 = vpop.f32.mrb[0].mxu0
        %v877 = vadd.f32 %v789, %v876
        %v878 = vpop.f32.mrb[0].mxu0
        %879 = vdwg.mxu0
        %v880 = vld [vmem:[#allocation2 + $0x190] sm:$0x3]
        %v881 = vlaneseq
        %v882 = vshrl.u32 %v881, 7
        %v883 = vsub.s32 0, %v882
        %v884 = vrot.slane %v880, %v883
        %v885 = vmul.f32 %v867, %v884
        %v886 = vmul.f32 %v872, %v884
        %v887 = vmul.f32 %v877, %v884
        %v888 = vlaneseq
        %v889 = vshrl.u32 %v888, 7
        %v890 = vsub.s32 1, %v889
        %v891 = vrot.slane %v880, %v890
        %v892 = vadd.f32 %v885, %v891
        %v893 = vadd.f32 %v886, %v891
        %v894 = vadd.f32 %v887, %v891
        %v895 = vmul.f32 %v892, 0.01
        %v896 = vmul.f32 %v893, 0.01
        %v897 = vmul.f32 %v894, 0.01
        %v898 = vmax.f32 %v892, %v895
        %v899 = vmax.f32 %v893, %v896
        %v900 = vmax.f32 %v894, %v897
        %v901 = vld [vmem:[#allocation2 + $0x198] sm:$0xff]
        %v902 = vld [vmem:[#allocation2 + $0x1a0] sm:$0xff]
        %v903 = vld [vmem:[#allocation2 + $0x1a8] sm:$0x1]
        %v904 = vlaneseq
        %v905 = vshrl.u32 %v904, 7
        %v906 = vsub.s32 0, %v905
        %v907 = vrot.slane %v903, %v906
        %vm908 = vcmask 130048
        %v910 = vsel %vm908, %v898, 0
        %v913 = vsel %vm908, %v899, 0
        %v916 = vsel %vm908, %v900, 0
        %918 = vmatprep.subr.mxu0 0.0
        %919 = vmatpush1.msra.mxu0 %v901
        %920 = vmatprep.subr.mxu0 0.0
        %921 = vmatpush1.msra.mxu0 %v902
        %922 = vmatprep.subr.mxu0 0.0
        %923 = vmatpush1.msra.mxu0 0.0
        %924 = vmatprep.subr.mxu0 0.0
        %925 = vmatpush1.msra.mxu0 0.0
        %926 = vmatprep.subr.mxu0 0.0
        %927 = vmatpush1.msra.mxu0 0.0
        %928 = vmatprep.subr.mxu0 0.0
        %929 = vmatpush1.msra.mxu0 0.0
        %930 = vmatprep.subr.mxu0 0.0
        %931 = vmatpush1.msra.mxu0 0.0
        %932 = vmatprep.subr.mxu0 0.0
        %933 = vmatpush1.msra.mxu0 0.0
        %934 = vmatprep.subr.mxu0 0.0
        %935 = vmatpush1.msra.mxu0 0.0
        %936 = vmatprep.subr.mxu0 0.0
        %937 = vmatpush1.msra.mxu0 0.0
        %938 = vmatprep.subr.mxu0 0.0
        %939 = vmatpush1.msra.mxu0 0.0
        %940 = vmatprep.subr.mxu0 0.0
        %941 = vmatpush1.msra.mxu0 0.0
        %942 = vmatprep.subr.mxu0 0.0
        %943 = vmatpush1.msra.mxu0 0.0
        %944 = vmatprep.subr.mxu0 0.0
        %945 = vmatpush1.msra.mxu0 0.0
        %946 = vmatprep.subr.mxu0 0.0
        %947 = vmatpush1.msra.mxu0 0.0
        %948 = vmatprep.subr.mxu0 0.0
        %949 = vmatpush1.msra.mxu0 0.0
        %950 = vmatprep.subr.mxu0 0.0
        %951 = vmatpush1.msra.mxu0 0.0
        %952 = vmatprep.subr.mxu0 0.0
        %953 = vmatpush1.msra.mxu0 0.0
        %954 = vmatprep.subr.mxu0 0.0
        %955 = vmatpush1.msra.mxu0 0.0
        %956 = vmatprep.subr.mxu0 0.0
        %957 = vmatpush1.msra.mxu0 0.0
        %958 = vmatprep.subr.mxu0 0.0
        %959 = vmatpush1.msra.mxu0 0.0
        %960 = vmatprep.subr.mxu0 0.0
        %961 = vmatpush1.msra.mxu0 0.0
        %962 = vmatprep.subr.mxu0 0.0
        %963 = vmatpush1.msra.mxu0 0.0
        %964 = vmatprep.subr.mxu0 0.0
        %965 = vmatpush1.msra.mxu0 0.0
        %966 = vmatprep.subr.mxu0 0.0
        %967 = vmatpush1.msra.mxu0 0.0
        %968 = vmatprep.subr.mxu0 0.0
        %969 = vmatpush1.msra.mxu0 0.0
        %970 = vmatprep.subr.mxu0 0.0
        %971 = vmatpush1.msra.mxu0 0.0
        %972 = vmatprep.subr.mxu0 0.0
        %973 = vmatpush1.msra.mxu0 0.0
        %974 = vmatprep.subr.mxu0 0.0
        %975 = vmatpush1.msra.mxu0 0.0
        %976 = vmatprep.subr.mxu0 0.0
        %977 = vmatpush1.msra.mxu0 0.0
        %978 = vmatprep.subr.mxu0 0.0
        %979 = vmatpush1.msra.mxu0 0.0
        %980 = vmatprep.subr.mxu0 0.0
        %981 = vmatpush1.msra.mxu0 0.0
        %982 = vmatprep.mubr.f32.mxu0 0.0
        %983 = vmatmul.mubr.f32.gmra.mrb[0].mxu0 %v910
        %v984 = vpop.f32.mrb[0].mxu0
        %v985 = vadd.f32 %v907, %v984
        %v986 = vpop.f32.mrb[0].mxu0
        %987 = vmatprep.mubr.f32.mxu0 0.0
        %988 = vmatmul.mubr.f32.gmra.mrb[0].mxu0 %v913
        %v989 = vpop.f32.mrb[0].mxu0
        %v990 = vadd.f32 %v907, %v989
        %v991 = vpop.f32.mrb[0].mxu0
        %992 = vmatprep.mubr.f32.mxu0 0.0
        %993 = vmatmul.mubr.f32.gmra.mrb[0].mxu0 %v916
        %v994 = vpop.f32.mrb[0].mxu0
        %v995 = vadd.f32 %v907, %v994
        %v996 = vpop.f32.mrb[0].mxu0
        %997 = vdwg.mxu0
        %v998 = vadd.f32 %v985, %v867
        %v999 = vadd.f32 %v990, %v872
        %v1000 = vadd.f32 %v995, %v877
        %1004 = vrot.lane.b32.xlu0 %v867, 112
        %v1005 = vpop.permute.xlu0 %1004
        %1006 = vrot.lane.b32.xlu0 %v872, 112
        %v1007 = vpop.permute.xlu0 %1006
        %1008 = vrot.lane.b32.xlu0 %v877, 112
        %v1009 = vpop.permute.xlu0 %1008
        %v1013 = vadd.f32 %v998, %v1005
        %v1014 = vadd.f32 %v999, %v1007
        %v1015 = vadd.f32 %v1000, %v1009
        %v1016 = vld [vmem:[%s274] sm:$0xff]
        %v1017 = vld [vmem:[%s274 + $0x8] sm:$0xff]
        %v1018 = vld [vmem:[%s274 + $0x10] sm:$0xff]
        %1020 = vset.pattern.permute.xlu0 0
        %1021 = vperm.xlu0 %1020, %v1016
        %v1022 = vpop.permute.xlu0 %1021
        %1025 = vset.pattern.permute.xlu0 0
        %1026 = vperm.xlu0 %1025, %v1017
        %v1027 = vpop.permute.xlu0 %1026
        %1030 = vset.pattern.permute.xlu0 0
        %1031 = vperm.xlu0 %1030, %v1018
        %v1032 = vpop.permute.xlu0 %1031
        %v1034 = vmul.f32 %v1013, %v1022
        %v1035 = vmul.f32 %v1014, %v1027
        %v1036 = vmul.f32 %v1015, %v1032
        %v1037 = vld [vmem:[#allocation2 + $0x1b0] sm:$0x3]
        %v1038 = vlaneseq
        %v1039 = vshrl.u32 %v1038, 7
        %v1040 = vsub.s32 0, %v1039
        %v1041 = vrot.slane %v1037, %v1040
        %v1042 = vmul.f32 %v1034, %v1041
        %v1043 = vmul.f32 %v1035, %v1041
        %v1044 = vmul.f32 %v1036, %v1041
        %v1045 = vlaneseq
        %v1046 = vshrl.u32 %v1045, 7
        %v1047 = vsub.s32 1, %v1046
        %v1048 = vrot.slane %v1037, %v1047
        %v1049 = vadd.f32 %v1042, %v1048
        %v1050 = vadd.f32 %v1043, %v1048
        %v1051 = vadd.f32 %v1044, %v1048
        %v1052 = vmul.f32 %v1049, 0.01
        %v1053 = vmul.f32 %v1050, 0.01
        %v1054 = vmul.f32 %v1051, 0.01
        %v1055 = vmax.f32 %v1049, %v1052
        %v1056 = vmax.f32 %v1050, %v1053
        %v1057 = vmax.f32 %v1051, %v1054
        %v1058 = vrot.slane %v1055, 7
        %v1059 = vrot.slane %v1056, 7
        %v1060 = vrot.slane %v1057, 7
        %v1061 = vlaneseq
        %v1062 = vshrl.u32 %v1061, 7
        %vm1063 = vcmp.lt.s32.totalorder %v1062, 1
        %v1064 = vsel %vm1063, %v1059, %v1060
        %v1065 = vsel %vm1063, %v1058, %v1059
        %v1066 = vsel %vm1063, %v1060, %v1058
        %v1067 = vld [vmem:[%s4] sm:$0xff]
        %v1068 = vld [vmem:[%s4 + $0x8] sm:$0xff]
        %v1069 = vld [vmem:[%s4 + $0x10] sm:$0xff]
        %1071 = vset.pattern.permute.xlu0 0
        %1072 = vperm.xlu0 %1071, %v1067
        %v1073 = vpop.permute.xlu0 %1072
        %1076 = vset.pattern.permute.xlu0 0
        %1077 = vperm.xlu0 %1076, %v1068
        %v1078 = vpop.permute.xlu0 %1077
        %1081 = vset.pattern.permute.xlu0 0
        %1082 = vperm.xlu0 %1081, %v1069
        %v1083 = vpop.permute.xlu0 %1082
        %v1085 = vmul.f32 %v1066, %v1073
        %v1086 = vmul.f32 %v1065, %v1078
        %v1087 = vmul.f32 %v1064, %v1083
        %v1088 = vrot.slane %v1055, 1
        %v1089 = vrot.slane %v1056, 1
        %v1090 = vrot.slane %v1057, 1
        %vm1091 = vcmp.lt.s32.totalorder %v1062, 7
        %v1092 = vsel %vm1091, %v1089, %v1090
        %v1093 = vsel %vm1091, %v1088, %v1089
        %v1094 = vsel %vm1091, %v1090, %v1088
        %1095 = vset.pattern.permute.xlu0 1
        %1096 = vperm.xlu0 %1095, %v1067
        %v1097 = vpop.permute.xlu0 %1096
        %1099 = vset.pattern.permute.xlu0 1
        %1100 = vperm.xlu0 %1099, %v1068
        %v1101 = vpop.permute.xlu0 %1100
        %1103 = vset.pattern.permute.xlu0 1
        %1104 = vperm.xlu0 %1103, %v1069
        %v1105 = vpop.permute.xlu0 %1104
        %v1107 = vmul.f32 %v1093, %v1097
        %v1108 = vmul.f32 %v1092, %v1101
        %v1109 = vmul.f32 %v1094, %v1105
        %1113 = vrot.lane.b32.xlu0 %v1055, 16
        %v1114 = vpop.permute.xlu0 %1113
        %1115 = vrot.lane.b32.xlu0 %v1056, 16
        %v1116 = vpop.permute.xlu0 %1115
        %1117 = vrot.lane.b32.xlu0 %v1057, 16
        %v1118 = vpop.permute.xlu0 %1117
        %1125 = vrot.lane.b32.xlu0 %v1107, 32
        %v1126 = vpop.permute.xlu0 %1125
        %1127 = vrot.lane.b32.xlu0 %v1108, 32
        %v1128 = vpop.permute.xlu0 %1127
        %1129 = vrot.lane.b32.xlu0 %v1109, 32
        %v1130 = vpop.permute.xlu0 %1129
        %v1134 = vsel %vm908, %v1085, %v1114
        %v1135 = vsel %vm908, %v1086, %v1116
        %v1136 = vsel %vm908, %v1087, %v1118
        %vm1137 = vcmask 261120
        %v1138 = vsel %vm1137, %v1134, %v1126
        %v1139 = vsel %vm1137, %v1135, %v1128
        %v1140 = vsel %vm1137, %v1136, %v1130
        %v1141 = vld [vmem:[#allocation2 + $0x1b8] sm:$0xff]
        %v1142 = vld [vmem:[#allocation2 + $0x1c0] sm:$0xff]
        %v1143 = vld [vmem:[#allocation2 + $0x1c8] sm:$0xff]
        %v1144 = vld [vmem:[#allocation2 + $0x1d0] sm:$0xff]
        %v1145 = vld [vmem:[#allocation2 + $0x1d8] sm:$0xff]
        %v1146 = vld [vmem:[#allocation2 + $0x1e0] sm:$0xff]
        %v1147 = vld [vmem:[#allocation2 + $0x1e8] sm:$0x1]
        %v1148 = vlaneseq
        %v1149 = vshrl.u32 %v1148, 7
        %v1150 = vsub.s32 0, %v1149
        %v1151 = vrot.slane %v1147, %v1150
        %vm1152 = vcmask 392192
        %v1154 = vsel %vm1152, %v1138, 0
        %v1157 = vsel %vm1152, %v1139, 0
        %v1160 = vsel %vm1152, %v1140, 0
        %1162 = vmatprep.subr.mxu0 0.0
        %1163 = vmatpush1.msra.mxu0 %v1141
        %1164 = vmatprep.subr.mxu0 0.0
        %1165 = vmatpush1.msra.mxu0 %v1142
        %1166 = vmatprep.subr.mxu0 0.0
        %1167 = vmatpush1.msra.mxu0 %v1143
        %1168 = vmatprep.subr.mxu0 0.0
        %1169 = vmatpush1.msra.mxu0 %v1144
        %1170 = vmatprep.subr.mxu0 0.0
        %1171 = vmatpush1.msra.mxu0 %v1145
        %1172 = vmatprep.subr.mxu0 0.0
        %1173 = vmatpush1.msra.mxu0 %v1146
        %1174 = vmatprep.subr.mxu0 0.0
        %1175 = vmatpush1.msra.mxu0 0.0
        %1176 = vmatprep.subr.mxu0 0.0
        %1177 = vmatpush1.msra.mxu0 0.0
        %1178 = vmatprep.subr.mxu0 0.0
        %1179 = vmatpush1.msra.mxu0 0.0
        %1180 = vmatprep.subr.mxu0 0.0
        %1181 = vmatpush1.msra.mxu0 0.0
        %1182 = vmatprep.subr.mxu0 0.0
        %1183 = vmatpush1.msra.mxu0 0.0
        %1184 = vmatprep.subr.mxu0 0.0
        %1185 = vmatpush1.msra.mxu0 0.0
        %1186 = vmatprep.subr.mxu0 0.0
        %1187 = vmatpush1.msra.mxu0 0.0
        %1188 = vmatprep.subr.mxu0 0.0
        %1189 = vmatpush1.msra.mxu0 0.0
        %1190 = vmatprep.subr.mxu0 0.0
        %1191 = vmatpush1.msra.mxu0 0.0
        %1192 = vmatprep.subr.mxu0 0.0
        %1193 = vmatpush1.msra.mxu0 0.0
        %1194 = vmatprep.subr.mxu0 0.0
        %1195 = vmatpush1.msra.mxu0 0.0
        %1196 = vmatprep.subr.mxu0 0.0
        %1197 = vmatpush1.msra.mxu0 0.0
        %1198 = vmatprep.subr.mxu0 0.0
        %1199 = vmatpush1.msra.mxu0 0.0
        %1200 = vmatprep.subr.mxu0 0.0
        %1201 = vmatpush1.msra.mxu0 0.0
        %1202 = vmatprep.subr.mxu0 0.0
        %1203 = vmatpush1.msra.mxu0 0.0
        %1204 = vmatprep.subr.mxu0 0.0
        %1205 = vmatpush1.msra.mxu0 0.0
        %1206 = vmatprep.subr.mxu0 0.0
        %1207 = vmatpush1.msra.mxu0 0.0
        %1208 = vmatprep.subr.mxu0 0.0
        %1209 = vmatpush1.msra.mxu0 0.0
        %1210 = vmatprep.subr.mxu0 0.0
        %1211 = vmatpush1.msra.mxu0 0.0
        %1212 = vmatprep.subr.mxu0 0.0
        %1213 = vmatpush1.msra.mxu0 0.0
        %1214 = vmatprep.subr.mxu0 0.0
        %1215 = vmatpush1.msra.mxu0 0.0
        %1216 = vmatprep.subr.mxu0 0.0
        %1217 = vmatpush1.msra.mxu0 0.0
        %1218 = vmatprep.subr.mxu0 0.0
        %1219 = vmatpush1.msra.mxu0 0.0
        %1220 = vmatprep.subr.mxu0 0.0
        %1221 = vmatpush1.msra.mxu0 0.0
        %1222 = vmatprep.subr.mxu0 0.0
        %1223 = vmatpush1.msra.mxu0 0.0
        %1224 = vmatprep.subr.mxu0 0.0
        %1225 = vmatpush1.msra.mxu0 0.0
        %1226 = vmatprep.mubr.f32.mxu0 0.0
        %1227 = vmatmul.mubr.f32.gmra.mrb[0].mxu0 %v1154
        %v1228 = vpop.f32.mrb[0].mxu0
        %v1229 = vadd.f32 %v1151, %v1228
        %v1230 = vpop.f32.mrb[0].mxu0
        %1231 = vmatprep.mubr.f32.mxu0 0.0
        %1232 = vmatmul.mubr.f32.gmra.mrb[0].mxu0 %v1157
        %v1233 = vpop.f32.mrb[0].mxu0
        %v1234 = vadd.f32 %v1151, %v1233
        %v1235 = vpop.f32.mrb[0].mxu0
        %1236 = vmatprep.mubr.f32.mxu0 0.0
        %1237 = vmatmul.mubr.f32.gmra.mrb[0].mxu0 %v1160
        %v1238 = vpop.f32.mrb[0].mxu0
        %v1239 = vadd.f32 %v1151, %v1238
        %v1240 = vpop.f32.mrb[0].mxu0
        %1241 = vdwg.mxu0
        %v1242 = vadd.f32 %v1229, %v1034
        %v1243 = vadd.f32 %v1234, %v1035
        %v1244 = vadd.f32 %v1239, %v1036
        %v1245 = vld [vmem:[#allocation2 + $0x1f0] sm:$0x3]
        %v1246 = vlaneseq
        %v1247 = vshrl.u32 %v1246, 7
        %v1248 = vsub.s32 0, %v1247
        %v1249 = vrot.slane %v1245, %v1248
        %v1250 = vmul.f32 %v1242, %v1249
        %v1251 = vmul.f32 %v1243, %v1249
        %v1252 = vmul.f32 %v1244, %v1249
        %v1253 = vlaneseq
        %v1254 = vshrl.u32 %v1253, 7
        %v1255 = vsub.s32 1, %v1254
        %v1256 = vrot.slane %v1245, %v1255
        %v1257 = vadd.f32 %v1250, %v1256
        %v1258 = vadd.f32 %v1251, %v1256
        %v1259 = vadd.f32 %v1252, %v1256
        %v1260 = vmul.f32 %v1257, 0.01
        %v1261 = vmul.f32 %v1258, 0.01
        %v1262 = vmul.f32 %v1259, 0.01
        %v1263 = vmax.f32 %v1257, %v1260
        %v1264 = vmax.f32 %v1258, %v1261
        %v1265 = vmax.f32 %v1259, %v1262
        %v1266 = vrot.slane %v1263, 6
        %v1267 = vrot.slane %v1264, 6
        %v1268 = vrot.slane %v1265, 6
        %vm1269 = vcmp.lt.s32.totalorder %v1062, 2
        %v1270 = vsel %vm1269, %v1267, %v1268
        %v1271 = vsel %vm1269, %v1266, %v1267
        %v1272 = vsel %vm1269, %v1268, %v1266
        %1273 = vset.pattern.permute.xlu0 2
        %1274 = vperm.xlu0 %1273, %v1067
        %v1275 = vpop.permute.xlu0 %1274
        %1277 = vset.pattern.permute.xlu0 2
        %1278 = vperm.xlu0 %1277, %v1068
        %v1279 = vpop.permute.xlu0 %1278
        %1281 = vset.pattern.permute.xlu0 2
        %1282 = vperm.xlu0 %1281, %v1069
        %v1283 = vpop.permute.xlu0 %1282
        %v1285 = vmul.f32 %v1272, %v1275
        %v1286 = vmul.f32 %v1271, %v1279
        %v1287 = vmul.f32 %v1270, %v1283
        %v1288 = vrot.slane %v1263, 2
        %v1289 = vrot.slane %v1264, 2
        %v1290 = vrot.slane %v1265, 2
        %vm1291 = vcmp.lt.s32.totalorder %v1062, 6
        %v1292 = vsel %vm1291, %v1289, %v1290
        %v1293 = vsel %vm1291, %v1288, %v1289
        %v1294 = vsel %vm1291, %v1290, %v1288
        %1295 = vset.pattern.permute.xlu0 3
        %1296 = vperm.xlu0 %1295, %v1067
        %v1297 = vpop.permute.xlu0 %1296
        %1299 = vset.pattern.permute.xlu0 3
        %1300 = vperm.xlu0 %1299, %v1068
        %v1301 = vpop.permute.xlu0 %1300
        %1303 = vset.pattern.permute.xlu0 3
        %1304 = vperm.xlu0 %1303, %v1069
        %v1305 = vpop.permute.xlu0 %1304
        %v1307 = vmul.f32 %v1293, %v1297
        %v1308 = vmul.f32 %v1292, %v1301
        %v1309 = vmul.f32 %v1294, %v1305
        %1313 = vrot.lane.b32.xlu0 %v1263, 16
        %v1314 = vpop.permute.xlu0 %1313
        %1315 = vrot.lane.b32.xlu0 %v1264, 16
        %v1316 = vpop.permute.xlu0 %1315
        %1317 = vrot.lane.b32.xlu0 %v1265, 16
        %v1318 = vpop.permute.xlu0 %1317
        %1325 = vrot.lane.b32.xlu0 %v1307, 32
        %v1326 = vpop.permute.xlu0 %1325
        %1327 = vrot.lane.b32.xlu0 %v1308, 32
        %v1328 = vpop.permute.xlu0 %1327
        %1329 = vrot.lane.b32.xlu0 %v1309, 32
        %v1330 = vpop.permute.xlu0 %1329
        %v1334 = vsel %vm908, %v1285, %v1314
        %v1335 = vsel %vm908, %v1286, %v1316
        %v1336 = vsel %vm908, %v1287, %v1318
        %v1337 = vsel %vm1137, %v1334, %v1326
        %v1338 = vsel %vm1137, %v1335, %v1328
        %v1339 = vsel %vm1137, %v1336, %v1330
        %v1340 = vld [vmem:[#allocation2 + $0x1f8] sm:$0xff]
        %v1341 = vld [vmem:[#allocation2 + $0x200] sm:$0xff]
        %v1342 = vld [vmem:[#allocation2 + $0x208] sm:$0xff]
        %v1343 = vld [vmem:[#allocation2 + $0x210] sm:$0xff]
        %v1344 = vld [vmem:[#allocation2 + $0x218] sm:$0xff]
        %v1345 = vld [vmem:[#allocation2 + $0x220] sm:$0xff]
        %v1346 = vld [vmem:[#allocation2 + $0x228] sm:$0x1]
        %v1347 = vlaneseq
        %v1348 = vshrl.u32 %v1347, 7
        %v1349 = vsub.s32 0, %v1348
        %v1350 = vrot.slane %v1346, %v1349
        %v1352 = vsel %vm1152, %v1337, 0
        %v1355 = vsel %vm1152, %v1338, 0
        %v1358 = vsel %vm1152, %v1339, 0
        %1360 = vmatprep.subr.mxu0 0.0
        %1361 = vmatpush1.msra.mxu0 %v1340
        %1362 = vmatprep.subr.mxu0 0.0
        %1363 = vmatpush1.msra.mxu0 %v1341
        %1364 = vmatprep.subr.mxu0 0.0
        %1365 = vmatpush1.msra.mxu0 %v1342
        %1366 = vmatprep.subr.mxu0 0.0
        %1367 = vmatpush1.msra.mxu0 %v1343
        %1368 = vmatprep.subr.mxu0 0.0
        %1369 = vmatpush1.msra.mxu0 %v1344
        %1370 = vmatprep.subr.mxu0 0.0
        %1371 = vmatpush1.msra.mxu0 %v1345
        %1372 = vmatprep.subr.mxu0 0.0
        %1373 = vmatpush1.msra.mxu0 0.0
        %1374 = vmatprep.subr.mxu0 0.0
        %1375 = vmatpush1.msra.mxu0 0.0
        %1376 = vmatprep.subr.mxu0 0.0
        %1377 = vmatpush1.msra.mxu0 0.0
        %1378 = vmatprep.subr.mxu0 0.0
        %1379 = vmatpush1.msra.mxu0 0.0
        %1380 = vmatprep.subr.mxu0 0.0
        %1381 = vmatpush1.msra.mxu0 0.0
        %1382 = vmatprep.subr.mxu0 0.0
        %1383 = vmatpush1.msra.mxu0 0.0
        %1384 = vmatprep.subr.mxu0 0.0
        %1385 = vmatpush1.msra.mxu0 0.0
        %1386 = vmatprep.subr.mxu0 0.0
        %1387 = vmatpush1.msra.mxu0 0.0
        %1388 = vmatprep.subr.mxu0 0.0
        %1389 = vmatpush1.msra.mxu0 0.0
        %1390 = vmatprep.subr.mxu0 0.0
        %1391 = vmatpush1.msra.mxu0 0.0
        %1392 = vmatprep.subr.mxu0 0.0
        %1393 = vmatpush1.msra.mxu0 0.0
        %1394 = vmatprep.subr.mxu0 0.0
        %1395 = vmatpush1.msra.mxu0 0.0
        %1396 = vmatprep.subr.mxu0 0.0
        %1397 = vmatpush1.msra.mxu0 0.0
        %1398 = vmatprep.subr.mxu0 0.0
        %1399 = vmatpush1.msra.mxu0 0.0
        %1400 = vmatprep.subr.mxu0 0.0
        %1401 = vmatpush1.msra.mxu0 0.0
        %1402 = vmatprep.subr.mxu0 0.0
        %1403 = vmatpush1.msra.mxu0 0.0
        %1404 = vmatprep.subr.mxu0 0.0
        %1405 = vmatpush1.msra.mxu0 0.0
        %1406 = vmatprep.subr.mxu0 0.0
        %1407 = vmatpush1.msra.mxu0 0.0
        %1408 = vmatprep.subr.mxu0 0.0
        %1409 = vmatpush1.msra.mxu0 0.0
        %1410 = vmatprep.subr.mxu0 0.0
        %1411 = vmatpush1.msra.mxu0 0.0
        %1412 = vmatprep.subr.mxu0 0.0
        %1413 = vmatpush1.msra.mxu0 0.0
        %1414 = vmatprep.subr.mxu0 0.0
        %1415 = vmatpush1.msra.mxu0 0.0
        %1416 = vmatprep.subr.mxu0 0.0
        %1417 = vmatpush1.msra.mxu0 0.0
        %1418 = vmatprep.subr.mxu0 0.0
        %1419 = vmatpush1.msra.mxu0 0.0
        %1420 = vmatprep.subr.mxu0 0.0
        %1421 = vmatpush1.msra.mxu0 0.0
        %1422 = vmatprep.subr.mxu0 0.0
        %1423 = vmatpush1.msra.mxu0 0.0
        %1424 = vmatprep.mubr.f32.mxu0 0.0
        %1425 = vmatmul.mubr.f32.gmra.mrb[0].mxu0 %v1352
        %v1426 = vpop.f32.mrb[0].mxu0
        %v1427 = vadd.f32 %v1350, %v1426
        %v1428 = vpop.f32.mrb[0].mxu0
        %1429 = vmatprep.mubr.f32.mxu0 0.0
        %1430 = vmatmul.mubr.f32.gmra.mrb[0].mxu0 %v1355
        %v1431 = vpop.f32.mrb[0].mxu0
        %v1432 = vadd.f32 %v1350, %v1431
        %v1433 = vpop.f32.mrb[0].mxu0
        %1434 = vmatprep.mubr.f32.mxu0 0.0
        %1435 = vmatmul.mubr.f32.gmra.mrb[0].mxu0 %v1358
        %v1436 = vpop.f32.mrb[0].mxu0
        %v1437 = vadd.f32 %v1350, %v1436
        %v1438 = vpop.f32.mrb[0].mxu0
        %1439 = vdwg.mxu0
        %v1440 = vadd.f32 %v1427, %v1242
        %v1441 = vadd.f32 %v1432, %v1243
        %v1442 = vadd.f32 %v1437, %v1244
        %v1443 = vadd.f32 %v1440, %v1034
        %v1444 = vadd.f32 %v1441, %v1035
        %v1445 = vadd.f32 %v1442, %v1036
        %v1446 = vld [vmem:[#allocation2 + $0x230] sm:$0xf]
        %v1447 = vlaneseq
        %v1448 = vshrl.u32 %v1447, 7
        %v1449 = vsub.s32 0, %v1448
        %v1450 = vrot.slane %v1446, %v1449
        %v1451 = vmul.f32 %v1443, %v1450
        %v1452 = vmul.f32 %v1444, %v1450
        %v1453 = vmul.f32 %v1445, %v1450
        %v1454 = vlaneseq
        %v1455 = vshrl.u32 %v1454, 7
        %v1456 = vsub.s32 1, %v1455
        %v1457 = vrot.slane %v1446, %v1456
        %v1458 = vadd.f32 %v1451, %v1457
        %v1459 = vadd.f32 %v1452, %v1457
        %v1460 = vadd.f32 %v1453, %v1457
        %v1461 = vmul.f32 %v1458, 0.01
        %v1462 = vmul.f32 %v1459, 0.01
        %v1463 = vmul.f32 %v1460, 0.01
        %v1464 = vmax.f32 %v1458, %v1461
        %v1465 = vmax.f32 %v1459, %v1462
        %v1466 = vmax.f32 %v1460, %v1463
        %v1467 = vld [vmem:[#allocation2 + $0x238] sm:$0xff]
        %v1468 = vld [vmem:[#allocation2 + $0x240] sm:$0xff]
        %v1469 = vld [vmem:[#allocation2 + $0x248] sm:$0x1]
        %v1470 = vlaneseq
        %v1471 = vshrl.u32 %v1470, 7
        %v1472 = vsub.s32 0, %v1471
        %v1473 = vrot.slane %v1469, %v1472
        %v1475 = vsel %vm908, %v1464, 0
        %v1478 = vsel %vm908, %v1465, 0
        %v1481 = vsel %vm908, %v1466, 0
        %1483 = vmatprep.subr.mxu0 0.0
        %1484 = vmatpush1.msra.mxu0 %v1467
        %1485 = vmatprep.subr.mxu0 0.0
        %1486 = vmatpush1.msra.mxu0 %v1468
        %1487 = vmatprep.subr.mxu0 0.0
        %1488 = vmatpush1.msra.mxu0 0.0
        %1489 = vmatprep.subr.mxu0 0.0
        %1490 = vmatpush1.msra.mxu0 0.0
        %1491 = vmatprep.subr.mxu0 0.0
        %1492 = vmatpush1.msra.mxu0 0.0
        %1493 = vmatprep.subr.mxu0 0.0
        %1494 = vmatpush1.msra.mxu0 0.0
        %1495 = vmatprep.subr.mxu0 0.0
        %1496 = vmatpush1.msra.mxu0 0.0
        %1497 = vmatprep.subr.mxu0 0.0
        %1498 = vmatpush1.msra.mxu0 0.0
        %1499 = vmatprep.subr.mxu0 0.0
        %1500 = vmatpush1.msra.mxu0 0.0
        %1501 = vmatprep.subr.mxu0 0.0
        %1502 = vmatpush1.msra.mxu0 0.0
        %1503 = vmatprep.subr.mxu0 0.0
        %1504 = vmatpush1.msra.mxu0 0.0
        %1505 = vmatprep.subr.mxu0 0.0
        %1506 = vmatpush1.msra.mxu0 0.0
        %1507 = vmatprep.subr.mxu0 0.0
        %1508 = vmatpush1.msra.mxu0 0.0
        %1509 = vmatprep.subr.mxu0 0.0
        %1510 = vmatpush1.msra.mxu0 0.0
        %1511 = vmatprep.subr.mxu0 0.0
        %1512 = vmatpush1.msra.mxu0 0.0
        %1513 = vmatprep.subr.mxu0 0.0
        %1514 = vmatpush1.msra.mxu0 0.0
        %1515 = vmatprep.subr.mxu0 0.0
        %1516 = vmatpush1.msra.mxu0 0.0
        %1517 = vmatprep.subr.mxu0 0.0
        %1518 = vmatpush1.msra.mxu0 0.0
        %1519 = vmatprep.subr.mxu0 0.0
        %1520 = vmatpush1.msra.mxu0 0.0
        %1521 = vmatprep.subr.mxu0 0.0
        %1522 = vmatpush1.msra.mxu0 0.0
        %1523 = vmatprep.subr.mxu0 0.0
        %1524 = vmatpush1.msra.mxu0 0.0
        %1525 = vmatprep.subr.mxu0 0.0
        %1526 = vmatpush1.msra.mxu0 0.0
        %1527 = vmatprep.subr.mxu0 0.0
        %1528 = vmatpush1.msra.mxu0 0.0
        %1529 = vmatprep.subr.mxu0 0.0
        %1530 = vmatpush1.msra.mxu0 0.0
        %1531 = vmatprep.subr.mxu0 0.0
        %1532 = vmatpush1.msra.mxu0 0.0
        %1533 = vmatprep.subr.mxu0 0.0
        %1534 = vmatpush1.msra.mxu0 0.0
        %1535 = vmatprep.subr.mxu0 0.0
        %1536 = vmatpush1.msra.mxu0 0.0
        %1537 = vmatprep.subr.mxu0 0.0
        %1538 = vmatpush1.msra.mxu0 0.0
        %1539 = vmatprep.subr.mxu0 0.0
        %1540 = vmatpush1.msra.mxu0 0.0
        %1541 = vmatprep.subr.mxu0 0.0
        %1542 = vmatpush1.msra.mxu0 0.0
        %1543 = vmatprep.subr.mxu0 0.0
        %1544 = vmatpush1.msra.mxu0 0.0
        %1545 = vmatprep.subr.mxu0 0.0
        %1546 = vmatpush1.msra.mxu0 0.0
        %1547 = vmatprep.mubr.f32.mxu0 0.0
        %1548 = vmatmul.mubr.f32.gmra.mrb[0].mxu0 %v1475
        %v1549 = vpop.f32.mrb[0].mxu0
        %v1550 = vadd.f32 %v1473, %v1549
        %v1551 = vpop.f32.mrb[0].mxu0
        %1552 = vmatprep.mubr.f32.mxu0 0.0
        %1553 = vmatmul.mubr.f32.gmra.mrb[0].mxu0 %v1478
        %v1554 = vpop.f32.mrb[0].mxu0
        %v1555 = vadd.f32 %v1473, %v1554
        %v1556 = vpop.f32.mrb[0].mxu0
        %1557 = vmatprep.mubr.f32.mxu0 0.0
        %1558 = vmatmul.mubr.f32.gmra.mrb[0].mxu0 %v1481
        %v1559 = vpop.f32.mrb[0].mxu0
        %v1560 = vadd.f32 %v1473, %v1559
        %v1561 = vpop.f32.mrb[0].mxu0
        %1562 = vdwg.mxu0
        %v1563 = vadd.f32 %v1550, %v1443
        %v1564 = vadd.f32 %v1555, %v1444
        %v1565 = vadd.f32 %v1560, %v1445
        %v1566 = vlaneseq
        %v1567 = vshrl.u32 %v1566, 7
        %v1568 = vsub.s32 2, %v1567
        %v1569 = vrot.slane %v1446, %v1568
        %v1570 = vmul.f32 %v1563, %v1569
        %v1571 = vmul.f32 %v1564, %v1569
        %v1572 = vmul.f32 %v1565, %v1569
        %v1573 = vlaneseq
        %v1574 = vshrl.u32 %v1573, 7
        %v1575 = vsub.s32 3, %v1574
        %v1576 = vrot.slane %v1446, %v1575
        %v1577 = vadd.f32 %v1570, %v1576
        %v1578 = vadd.f32 %v1571, %v1576
        %v1579 = vadd.f32 %v1572, %v1576
        %v1580 = vmul.f32 %v1577, 0.01
        %v1581 = vmul.f32 %v1578, 0.01
        %v1582 = vmul.f32 %v1579, 0.01
        %v1583 = vmax.f32 %v1577, %v1580
        %v1584 = vmax.f32 %v1578, %v1581
        %v1585 = vmax.f32 %v1579, %v1582
        %1589 = vrot.lane.b32.xlu0 %v1563, 16
        %v1590 = vpop.permute.xlu0 %1589
        %1591 = vrot.lane.b32.xlu0 %v1564, 16
        %v1592 = vpop.permute.xlu0 %1591
        %1593 = vrot.lane.b32.xlu0 %v1565, 16
        %v1594 = vpop.permute.xlu0 %1593
        %1601 = vrot.lane.b32.xlu0 %v1443, 32
        %v1602 = vpop.permute.xlu0 %1601
        %1603 = vrot.lane.b32.xlu0 %v1444, 32
        %v1604 = vpop.permute.xlu0 %1603
        %1605 = vrot.lane.b32.xlu0 %v1445, 32
        %v1606 = vpop.permute.xlu0 %1605
        %v1610 = vsel %vm908, %v1583, %v1590
        %v1611 = vsel %vm908, %v1584, %v1592
        %v1612 = vsel %vm908, %v1585, %v1594
        %v1613 = vsel %vm1137, %v1610, %v1602
        %v1614 = vsel %vm1137, %v1611, %v1604
        %v1615 = vsel %vm1137, %v1612, %v1606
        %v1616 = vld [vmem:[#allocation2 + $0x250] sm:$0xff]
        %v1617 = vld [vmem:[#allocation2 + $0x258] sm:$0xff]
        %v1618 = vld [vmem:[#allocation2 + $0x260] sm:$0xff]
        %v1619 = vld [vmem:[#allocation2 + $0x268] sm:$0xff]
        %v1620 = vld [vmem:[#allocation2 + $0x270] sm:$0xff]
        %v1621 = vld [vmem:[#allocation2 + $0x278] sm:$0xff]
        %v1622 = vld [vmem:[#allocation2 + $0x280] sm:$0x1]
        %v1623 = vlaneseq
        %v1624 = vshrl.u32 %v1623, 7
        %v1625 = vsub.s32 0, %v1624
        %v1626 = vrot.slane %v1622, %v1625
        %v1628 = vsel %vm1152, %v1613, 0
        %v1631 = vsel %vm1152, %v1614, 0
        %v1634 = vsel %vm1152, %v1615, 0
        %1636 = vmatprep.subr.mxu0 0.0
        %1637 = vmatpush1.msra.mxu0 %v1616
        %1638 = vmatprep.subr.mxu0 0.0
        %1639 = vmatpush1.msra.mxu0 %v1617
        %1640 = vmatprep.subr.mxu0 0.0
        %1641 = vmatpush1.msra.mxu0 %v1618
        %1642 = vmatprep.subr.mxu0 0.0
        %1643 = vmatpush1.msra.mxu0 %v1619
        %1644 = vmatprep.subr.mxu0 0.0
        %1645 = vmatpush1.msra.mxu0 %v1620
        %1646 = vmatprep.subr.mxu0 0.0
        %1647 = vmatpush1.msra.mxu0 %v1621
        %1648 = vmatprep.subr.mxu0 0.0
        %1649 = vmatpush1.msra.mxu0 0.0
        %1650 = vmatprep.subr.mxu0 0.0
        %1651 = vmatpush1.msra.mxu0 0.0
        %1652 = vmatprep.subr.mxu0 0.0
        %1653 = vmatpush1.msra.mxu0 0.0
        %1654 = vmatprep.subr.mxu0 0.0
        %1655 = vmatpush1.msra.mxu0 0.0
        %1656 = vmatprep.subr.mxu0 0.0
        %1657 = vmatpush1.msra.mxu0 0.0
        %1658 = vmatprep.subr.mxu0 0.0
        %1659 = vmatpush1.msra.mxu0 0.0
        %1660 = vmatprep.subr.mxu0 0.0
        %1661 = vmatpush1.msra.mxu0 0.0
        %1662 = vmatprep.subr.mxu0 0.0
        %1663 = vmatpush1.msra.mxu0 0.0
        %1664 = vmatprep.subr.mxu0 0.0
        %1665 = vmatpush1.msra.mxu0 0.0
        %1666 = vmatprep.subr.mxu0 0.0
        %1667 = vmatpush1.msra.mxu0 0.0
        %1668 = vmatprep.subr.mxu0 0.0
        %1669 = vmatpush1.msra.mxu0 0.0
        %1670 = vmatprep.subr.mxu0 0.0
        %1671 = vmatpush1.msra.mxu0 0.0
        %1672 = vmatprep.subr.mxu0 0.0
        %1673 = vmatpush1.msra.mxu0 0.0
        %1674 = vmatprep.subr.mxu0 0.0
        %1675 = vmatpush1.msra.mxu0 0.0
        %1676 = vmatprep.subr.mxu0 0.0
        %1677 = vmatpush1.msra.mxu0 0.0
        %1678 = vmatprep.subr.mxu0 0.0
        %1679 = vmatpush1.msra.mxu0 0.0
        %1680 = vmatprep.subr.mxu0 0.0
        %1681 = vmatpush1.msra.mxu0 0.0
        %1682 = vmatprep.subr.mxu0 0.0
        %1683 = vmatpush1.msra.mxu0 0.0
        %1684 = vmatprep.subr.mxu0 0.0
        %1685 = vmatpush1.msra.mxu0 0.0
        %1686 = vmatprep.subr.mxu0 0.0
        %1687 = vmatpush1.msra.mxu0 0.0
        %1688 = vmatprep.subr.mxu0 0.0
        %1689 = vmatpush1.msra.mxu0 0.0
        %1690 = vmatprep.subr.mxu0 0.0
        %1691 = vmatpush1.msra.mxu0 0.0
        %1692 = vmatprep.subr.mxu0 0.0
        %1693 = vmatpush1.msra.mxu0 0.0
        %1694 = vmatprep.subr.mxu0 0.0
        %1695 = vmatpush1.msra.mxu0 0.0
        %1696 = vmatprep.subr.mxu0 0.0
        %1697 = vmatpush1.msra.mxu0 0.0
        %1698 = vmatprep.subr.mxu0 0.0
        %1699 = vmatpush1.msra.mxu0 0.0
        %1700 = vmatprep.mubr.f32.mxu0 0.0
        %1701 = vmatmul.mubr.f32.gmra.mrb[0].mxu0 %v1628
        %v1702 = vpop.f32.mrb[0].mxu0
        %v1703 = vadd.f32 %v1626, %v1702
        %v1704 = vpop.f32.mrb[0].mxu0
        %1705 = vmatprep.mubr.f32.mxu0 0.0
        %1706 = vmatmul.mubr.f32.gmra.mrb[0].mxu0 %v1631
        %v1707 = vpop.f32.mrb[0].mxu0
        %v1708 = vadd.f32 %v1626, %v1707
        %v1709 = vpop.f32.mrb[0].mxu0
        %1710 = vmatprep.mubr.f32.mxu0 0.0
        %1711 = vmatmul.mubr.f32.gmra.mrb[0].mxu0 %v1634
        %v1712 = vpop.f32.mrb[0].mxu0
        %v1713 = vadd.f32 %v1626, %v1712
        %v1714 = vpop.f32.mrb[0].mxu0
        %1715 = vdwg.mxu0
        %vm1716 = vcmask 39936
        %v1717 = vsel %vm1716, %v1703, -inf
        %1718 = vmax.xlane.f32.xlu0 %v1717
        %v1719 = vpop.xlane.xlu0 %1718
        %v1720 = vsel %vm1716, %v1708, -inf
        %1721 = vmax.xlane.f32.xlu0 %v1720
        %v1722 = vpop.xlane.xlu0 %1721
        %v1723 = vsel %vm1716, %v1713, -inf
        %1724 = vmax.xlane.f32.xlu0 %v1723
        %v1725 = vpop.xlane.xlu0 %1724
        %v1726 = vsub.f32 %v1703, %v1719
        %v1727 = vsub.f32 %v1708, %v1722
        %v1728 = vsub.f32 %v1713, %v1725
        %v1729 = vmul.f32 %v1726, 1.442695
        %v1730 = vpow.pop %v1729
        %v1731 = vmul.f32 %v1727, 1.442695
        %v1732 = vpow.pop %v1731
        %v1733 = vmul.f32 %v1728, 1.442695
        %v1734 = vpow.pop %v1733
        %v1735 = vsel %vm1716, %v1730, 0.0
        %1736 = vadd.xlane.f32.xlu0 %v1735
        %v1737 = vpop.xlane.xlu0 %1736
        %v1738 = vsel %vm1716, %v1732, 0.0
        %1739 = vadd.xlane.f32.xlu0 %v1738
        %v1740 = vpop.xlane.xlu0 %1739
        %v1741 = vsel %vm1716, %v1734, 0.0
        %1742 = vadd.xlane.f32.xlu0 %v1741
        %v1743 = vpop.xlane.xlu0 %1742
        %v1744 = vrcp.pop %v1737
        %v1745 = vrcp.pop %v1740
        %v1746 = vrcp.pop %v1743
        %v1747 = vmul.f32 %v1730, %v1744
        %v1748 = vmul.f32 %v1732, %v1745
        %v1749 = vmul.f32 %v1734, %v1746
        %1750 = vst.msk [vmem:[%s279] sm:$0xff] %vm908, %v1034
        %1751 = vst.msk [vmem:[%s279 + $0x8] sm:$0xff] %vm908, %v1035
        %1752 = vst.msk [vmem:[%s279 + $0x10] sm:$0xff] %vm908, %v1036
        %1756 = vrot.lane.b32.xlu0 %v1747, 16
        %v1757 = vpop.permute.xlu0 %1756
        %1758 = vrot.lane.b32.xlu0 %v1748, 16
        %v1759 = vpop.permute.xlu0 %1758
        %1760 = vrot.lane.b32.xlu0 %v1749, 16
        %v1761 = vpop.permute.xlu0 %1760
        %vm1765 = vcmask 171136
        %1766 = vst.msk [vmem:[%s279] sm:$0xff] %vm1765, %v1757
        %1767 = vst.msk [vmem:[%s279 + $0x8] sm:$0xff] %vm1765, %v1759
        %1768 = vst.msk [vmem:[%s279 + $0x10] sm:$0xff] %vm1765, %v1761
        %p1769 = scmp.lt.s32.totalorder %s17, 1
        %s1770 = scalar_select %p1769, %s17, 1
        %s1771 = smul.addr %s1770, 3
        %s1772 = smul.addr %s1771, 8
        %s1773 = scalar_lea.vmem %s5, %s1772
        // Predicated region
        $region45: #{sleepnet_forward_pallas.1} parent=39 // pred_check
          %p1774 = pneg %p155
        $region46: #{sleepnet_forward_pallas.1} parent=39 // pred_check_branch
          %1776 = sbr.rel (%p1774) target = $region48
        $region47: #{sleepnet_forward_pallas.1} parent=39 // pred_region
          _
        $region48: #{sleepnet_forward_pallas.1} parent=39 // pred_fallthru
          _
      $region40: #{sleepnet_forward_pallas.1} parent=5 // pred_fallthru
        _
      %p1777 = scmp.le.s32.totalorder 2, %s12
      // Predicated region
      $region49: #{sleepnet_forward_pallas.1} parent=5 // pred_check
        %p1778 = pneg %p1777
      $region50: #{sleepnet_forward_pallas.1} parent=5 // pred_check_branch
        %1780 = sbr.rel (%p1778) target = $region52
      $region51: #{sleepnet_forward_pallas.1} parent=5 // pred_region
        %s1781 = ssub.s32 %s12, 2
        // Predicated region
        $region53: #{sleepnet_forward_pallas.1} parent=51 // pred_check
          %p1782 = pneg %p161
        $region54: #{sleepnet_forward_pallas.1} parent=51 // pred_check_branch
          %1784 = sbr.rel (%p1782) target = $region56
        $region55: #{sleepnet_forward_pallas.1} parent=51 // pred_region
          %p1785 = scmp.lt.s32.totalorder %s18, 1
          %s1786 = scalar_select %p1785, %s18, 1
          %s1787 = smul.addr %s1786, 3
          %s1788 = smul.addr %s1787, 8
          %s1789 = scalar_lea.vmem %s5, %s1788
        $region56: #{sleepnet_forward_pallas.1} parent=51 // pred_fallthru
          _
      $region52: #{sleepnet_forward_pallas.1} parent=5 // pred_fallthru
        _
    $region6: #{sleepnet_forward_pallas.1} parent=1 // loop_footer
      %s16 = sadd.s32 1, %s12
    $region7: #{sleepnet_forward_pallas.1} parent=1 // loop_footer_branch
      %11 = sbr.rel target = $region3
    $region8: #{sleepnet_forward_pallas.1} parent=1 // loop_exit
      _
    %1790 = vsyncpa [#allocation3], 1
    %s1791 = scalar_lea.sflag [#allocation3], 1
    %1792 = vsyncpa %s1791, 1

</llo_original>
